<compile_context>
chip_gen: v6e
topology: v6e:2x2x1
jax: 0.10.0
libtpu: 0.0.40
codegen_flags: <defaults>
</compile_context>

<pallas_src>
import functools

import jax
import jax.numpy as jnp
from jax.experimental import pallas as pl
from jax.experimental.pallas import tpu as pltpu


def _round_up(x, m):
    return ((x + m - 1) // m) * m


# ---------------------------------------------------------------------------
# Fused kernel: im2col-in-VMEM 3x3 conv + bias + SiLU + 1x1 conv + bias
# ---------------------------------------------------------------------------
def _fused_head_kernel(x_ref, w1_ref, b1_ref, w2_ref, b2_ref, out_ref,
                       xflat_ref, im2col_ref, *, H, W, TH, C):
    # x_ref     : (1, H*W, C)     raw image rows (row = h*W + w), resident across row tiles
    # w1_ref    : (KP, MIDP)      im2col-packed 3x3 conv weights (row = tap*CP + c)
    # b1_ref    : (1, MIDP)
    # w2_ref    : (MIDP, OUTP)    1x1 conv (block-diagonal when heads are fused)
    # b2_ref    : (1, OUTP)
    # out_ref   : (1, TH*W, OUTP) lane-dense output row tile
    # xflat_ref : (PAD + H*W + PAD, CP) zero-haloed flat image (scratch)
    # im2col_ref: (TH*W, KP)      im2col tile (scratch)
    r = pl.program_id(1)
    HW = H * W
    TILE = TH * W
    CP = xflat_ref.shape[1]
    PAD = _round_up(W + 1, 8)

    @pl.when(r == 0)
    def _():
        # Build the zero-haloed, channel-padded flat image once per image and
        # clear the im2col scratch (its tail columns are never written below,
        # and uninitialized VMEM could hold NaNs that survive a 0-weight dot).
        xflat_ref[...] = jnp.zeros_like(xflat_ref)
        xflat_ref[pl.ds(PAD, HW), :C] = x_ref[0]
        im2col_ref[...] = jnp.zeros_like(im2col_ref)

    row0 = r * TILE

    # Column-validity masks for SAME padding along W (the H halo is handled by
    # the zero rows of xflat_ref; row0 is a multiple of W so local iota works).
    w_pos = jax.lax.broadcasted_iota(jnp.int32, (TILE, CP), 0) % W
    mask_l = w_pos >= 1          # tap column dw == 0 valid
    mask_r = w_pos <= W - 2      # tap column dw == 2 valid

    # Assemble the (TILE, KP) im2col tile from 9 shifted row-slices.
    for t in range(9):           # static unroll; offsets are compile-time
        dh, dw = t // 3, t % 3
        shift = (dh - 1) * W + (dw - 1)
        slab = xflat_ref[pl.ds(row0 + PAD + shift, TILE), :]
        if dw == 0:
            slab = jnp.where(mask_l, slab, 0.0)
        elif dw == 2:
            slab = jnp.where(mask_r, slab, 0.0)
        im2col_ref[:, t * CP:(t + 1) * CP] = slab

    # One K-dense MXU matmul instead of nine K=C pushes.
    a = im2col_ref[...].astype(w1_ref.dtype)
    h = jnp.dot(a, w1_ref[...], preferred_element_type=jnp.float32) + b1_ref[...]
    h = h * jax.nn.sigmoid(h)    # SiLU in f32 (EUP sigmoid + VPU mul, v5e-safe)

    o = (jnp.dot(h.astype(w2_ref.dtype), w2_ref[...],
                 preferred_element_type=jnp.float32) + b2_ref[...])
    out_ref[...] = o[None, :, :].astype(out_ref.dtype)   # unmasked 128-lane store


# ---------------------------------------------------------------------------
# Wrapper: one pallas_call for an arbitrary number of packed heads
# ---------------------------------------------------------------------------
def run_fused_heads(x_nchw, fused_weights, out_slices, *, row_tile=None):
    """Runs the fused conv heads on NCHW input, returns one NHWC array per head."""
    N, C, H, W = x_nchw.shape
    w1, b1, w2, b2 = fused_weights
    KP, MIDP = w1.shape
    OUTP = w2.shape[1]
    CP = _round_up(C, 8)
    assert 9 * CP <= KP, "input channels inconsistent with packed weights"

    if row_tile is None:
        row_tile = H // 2 if (H % 2 == 0 and ((H // 2) * W) % 8 == 0) else H
    TH = row_tile
    assert H % TH == 0 and (TH * W) % 8 == 0
    R = H // TH
    HW = H * W
    PAD = _round_up(W + 1, 8)

    # Single boundary layout pass (NCHW -> flat NHWC rows); padding is in-kernel.
    # TODO(synk): fold this transpose into the kernel input DMA at real sizes.
    x_flat = jnp.transpose(x_nchw, (0, 2, 3, 1)).reshape(N, HW, C)

    kernel = functools.partial(_fused_head_kernel, H=H, W=W, TH=TH, C=C)

    itemsize = lambda a: int(jnp.dtype(a.dtype).itemsize)
    cost = pl.CostEstimate(
        flops=int(N * (2 * HW * KP * MIDP + 2 * HW * MIDP * OUTP)),
        transcendentals=int(N * HW * MIDP),
        bytes_accessed=int(x_flat.size * itemsize(x_flat)
                           + w1.size * itemsize(w1) + b1.size * itemsize(b1)
                           + w2.size * itemsize(w2) + b2.size * itemsize(b2)
                           + N * HW * OUTP * 4),
    )

    out = pl.pallas_call(
        kernel,
        out_shape=jax.ShapeDtypeStruct((N, HW, OUTP), jnp.float32),
        grid_spec=pltpu.PrefetchScalarGridSpec(
            num_scalar_prefetch=0,
            grid=(N, R),
            in_specs=[
                pl.BlockSpec((1, HW, C), lambda n, r: (n, 0, 0)),      # resident across r
                pl.BlockSpec((KP, MIDP), lambda n, r: (0, 0)),
                pl.BlockSpec((1, MIDP), lambda n, r: (0, 0)),
                pl.BlockSpec((MIDP, OUTP), lambda n, r: (0, 0)),
                pl.BlockSpec((1, OUTP), lambda n, r: (0, 0)),
            ],
            out_specs=pl.BlockSpec((1, TH * W, OUTP), lambda n, r: (n, r, 0)),
            scratch_shapes=[
                pltpu.VMEM((2 * PAD + HW, CP), jnp.float32),   # zero-haloed flat image
                pltpu.VMEM((TH * W, KP), jnp.float32),         # im2col tile
            ]),
        compiler_params=pltpu.CompilerParams(
            dimension_semantics=("parallel", "arbitrary"),
            vmem_limit_bytes=32 * 1024 * 1024),
        cost_estimate=cost,
    )(x_flat, w1, b1, w2, b2)

    # Slice the lane-dense packed output back into per-head NHWC tensors.
    results = []
    for off, width in out_slices:
        results.append(out[:, :, off:off + width].reshape(N, H, W, width))
    return results


# ---------------------------------------------------------------------------
# Parameter construction / packing (done once at model build time)
# ---------------------------------------------------------------------------
def init_head_params(key, c_in, c_mid, c_out):
    k1, k2, k3, k4 = jax.random.split(key, 4)
    w1 = jax.random.normal(k1, (9, c_in, c_mid), jnp.float32) * 0.05  # 3x3 conv taps
    b1 = jax.random.normal(k2, (c_mid,), jnp.float32) * 0.01
    w2 = jax.random.normal(k3, (c_mid, c_out), jnp.float32) * 0.05    # 1x1 conv
    b2 = jax.random.normal(k4, (c_out,), jnp.float32) * 0.01
    return (w1, b1, w2, b2)


def build_fused_weights(heads, matmul_dtype=jnp.float32):
    """Packs N heads into one set of im2col-ready, lane-dense fused weights.

    The 3x3 conv weights of all heads are flattened to (tap*CP + c, mid) and
    concatenated along the hidden axis; the 1x1 conv becomes a block-diagonal
    matmul so the heads stay independent.  Padded rows/cols are zero, so
    padded lanes contribute exactly 0 and are sliced off outside the kernel.
    """
    c_in = heads[0][0].shape[1]
    mids = [h[0].shape[2] for h in heads]
    outs = [h[2].shape[1] for h in heads]
    CP = _round_up(c_in, 8)
    KP = _round_up(9 * CP, 128)          # im2col contraction depth, lane-dense
    MIDP = _round_up(sum(mids), 8)
    OUTP = _round_up(sum(outs), 128)     # lane-dense packed output

    w1 = jnp.zeros((KP, MIDP), jnp.float32)
    b1 = jnp.zeros((1, MIDP), jnp.float32)
    w2 = jnp.zeros((MIDP, OUTP), jnp.float32)
    b2 = jnp.zeros((1, OUTP), jnp.float32)

    out_slices = []
    mo = 0
    oo = 0
    for (hw1, hb1, hw2, hb2), m, o in zip(heads, mids, outs):
        for t in range(9):
            w1 = w1.at[t * CP:t * CP + c_in, mo:mo + m].set(hw1[t])
        b1 = b1.at[0, mo:mo + m].set(hb1)
        w2 = w2.at[mo:mo + m, oo:oo + o].set(hw2)
        b2 = b2.at[0, oo:oo + o].set(hb2)
        out_slices.append((oo, o))
        mo += m
        oo += o
    # bf16 weights (recommended on v6e/v7x) halve weight HBM and use the bf16
    # MXU path; biases stay f32 and all elementwise math stays f32.
    return (w1.astype(matmul_dtype), b1, w2.astype(matmul_dtype), b2), out_slices


# ---------------------------------------------------------------------------
# Model
# ---------------------------------------------------------------------------
class ConcateModel:
    """JAX/Pallas analogue of the PyTorch `concate_model`."""

    def __init__(self, key, c_in=3, c_mid=32, matmul_dtype=jnp.float32):
        km, kc, kh = jax.random.split(key, 3)
        # YOLOX head channel layout: 4 bbox + 1 obj + num_classes
        self.multi_params = init_head_params(km, c_in, c_mid, 4 + 1 + 3)    # multi
        self.clothes_params = init_head_params(kc, c_in, c_mid, 4 + 1 + 2)  # clothes
        self.hat_params = init_head_params(kh, c_in, c_mid, 4 + 1 + 2)      # hat
        # Pack weights once (padded / fused), not per call.
        self._single = build_fused_weights([self.multi_params], matmul_dtype)
        self._all = build_fused_weights(
            [self.multi_params, self.clothes_params, self.hat_params], matmul_dtype)

    def __call__(self, x_nchw, method):
        if method == 1:
            fused, slices = self._single
            return run_fused_heads(x_nchw, fused, slices)[0]
        elif method == 2:
            fused, slices = self._all
            return run_fused_heads(x_nchw, fused, slices)  # [multi, clothes, hat]
        else:
            raise ValueError("method must be 1 or 2")


# ---------------------------------------------------------------------------
# Pure-JAX reference for correctness checking
# ---------------------------------------------------------------------------
def ref_head(x_nhwc, params):
    w1, b1, w2, b2 = params  # (9,C,mid), (mid,), (mid,out), (out,)
    N, H, W, C = x_nhwc.shape
    xp = jnp.pad(x_nhwc, ((0, 0), (1, 1), (1, 1), (0, 0)))
    acc = jnp.zeros((N, H, W, w1.shape[2]), jnp.float32)
    for t in range(9):
        dh, dw = t // 3, t % 3
        acc = acc + jnp.einsum('nhwc,cm->nhwm',
                               xp[:, dh:dh + H, dw:dw + W, :], w1[t])
    h = acc + b1
    h = h * jax.nn.sigmoid(h)
    return jnp.einsum('nhwm,mo->nhwo', h, w2) + b2


if __name__ == "__main__":
    import numpy as np

    key = jax.random.PRNGKey(0)
    k_param, k_x = jax.random.split(key)

    model = ConcateModel(k_param, c_in=3, c_mid=32)

    # Small NCHW input consistent with an image detector: (batch=2, C=3, 16, 16)
    x = jax.random.normal(k_x, (2, 3, 16, 16), jnp.float32)
    x_nhwc = jnp.transpose(x, (0, 2, 3, 1))

    out1 = model(x, method=1)
    jax.block_until_ready(out1)
    assert out1.shape == (2, 16, 16, 8)

    out2 = model(x, method=2)
    jax.block_until_ready(out2)
    assert out2[0].shape == (2, 16, 16, 8)
    assert out2[1].shape == (2, 16, 16, 7)
    assert out2[2].shape == (2, 16, 16, 7)

    # Fused three-head call must match the single-head path and the JAX reference.
    np.testing.assert_allclose(np.asarray(out1), np.asarray(out2[0]),
                               rtol=1e-4, atol=1e-4)
    np.testing.assert_allclose(np.asarray(out1),
                               np.asarray(ref_head(x_nhwc, model.multi_params)),
                               rtol=1e-4, atol=1e-4)
    np.testing.assert_allclose(np.asarray(out2[1]),
                               np.asarray(ref_head(x_nhwc, model.clothes_params)),
                               rtol=1e-4, atol=1e-4)
    np.testing.assert_allclose(np.asarray(out2[2]),
                               np.asarray(ref_head(x_nhwc, model.hat_params)),
                               rtol=1e-4, atol=1e-4)

    # bf16 matmul-input path (recommended on v6e/v7x): same master params,
    # looser tolerance (bf16 has ~3 decimal digits).
    model_bf16 = ConcateModel(k_param, c_in=3, c_mid=32,
                              matmul_dtype=jnp.bfloat16)
    out_bf16 = model_bf16(x, method=2)
    jax.block_until_ready(out_bf16)
    np.testing.assert_allclose(np.asarray(out_bf16[0]),
                               np.asarray(ref_head(x_nhwc, model.multi_params)),
                               rtol=2e-2, atol=2e-2)
    np.testing.assert_allclose(np.asarray(out_bf16[2]),
                               np.asarray(ref_head(x_nhwc, model.hat_params)),
                               rtol=2e-2, atol=2e-2)

    print("KERNEL_OK")
</pallas_src>

<mosaic_0001>
module attributes {stable_mosaic.version = 11 : i64} {
  func.func @_fused_head_kernel(%arg0: i32, %arg1: i32, %arg2: memref<1x256x3xf32, #tpu.memory_space<vmem>>, %arg3: memref<128x32xf32, #tpu.memory_space<vmem>>, %arg4: memref<1x32xf32, #tpu.memory_space<vmem>>, %arg5: memref<32x128xf32, #tpu.memory_space<vmem>>, %arg6: memref<1x128xf32, #tpu.memory_space<vmem>>, %arg7: memref<1x128x128xf32, #tpu.memory_space<vmem>>, %arg8: memref<304x8xf32, #tpu.memory_space<vmem>>, %arg9: memref<128x128xf32, #tpu.memory_space<vmem>>) attributes {dimension_semantics = [#tpu.dimension_semantics<parallel>, #tpu.dimension_semantics<arbitrary>], iteration_bounds = array<i64: 2, 2>, scalar_prefetch = 0 : i64, scratch_operands = 2 : i64, tpu.core_type = #tpu.core_type<tc>, window_params = [{transform_indices = @transform_0, window_bounds = array<i64: 1, 256, 3>}, {pipeline_mode = #tpu.pipeline_mode<synchronous>, transform_indices = @transform_1, window_bounds = array<i64: 128, 32>}, {pipeline_mode = #tpu.pipeline_mode<synchronous>, transform_indices = @transform_2, window_bounds = array<i64: 1, 32>}, {pipeline_mode = #tpu.pipeline_mode<synchronous>, transform_indices = @transform_3, window_bounds = array<i64: 32, 128>}, {pipeline_mode = #tpu.pipeline_mode<synchronous>, transform_indices = @transform_4, window_bounds = array<i64: 1, 128>}, {transform_indices = @transform_5, window_bounds = array<i64: 1, 128, 128>}]} {
    %c0_i32 = arith.constant 0 : i32
    %0 = arith.cmpi eq, %arg1, %c0_i32 : i32
    %1 = arith.extui %0 : i1 to i32
    %c0_i32_0 = arith.constant 0 : i32
    %2 = arith.cmpi ne, %1, %c0_i32_0 : i32
    scf.if %2 {
      %cst_56 = arith.constant 0.000000e+00 : f32
      %101 = vector.broadcast %cst_56 : f32 to vector<304x8xf32>
      %c0_57 = arith.constant 0 : index
      %c0_58 = arith.constant 0 : index
      %102 = vector.load %arg8[%c0_57, %c0_58] : memref<304x8xf32, #tpu.memory_space<vmem>>, vector<304x8xf32>
      tpu.vector_store %arg8[%c0_57, %c0_58], %101 {strides = array<i32>} : memref<304x8xf32, #tpu.memory_space<vmem>>, vector<304x8xf32>,
      %c0_59 = arith.constant 0 : index
      %c0_60 = arith.constant 0 : index
      %c0_61 = arith.constant 0 : index
      %103 = vector.load %arg2[%c0_59, %c0_60, %c0_61] : memref<1x256x3xf32, #tpu.memory_space<vmem>>, vector<1x256x3xf32>
      %104 = vector.shape_cast %103 : vector<1x256x3xf32> to vector<256x3xf32>
      %c24_62 = arith.constant 24 : index
      %c0_63 = arith.constant 0 : index
      %105 = vector.load %arg8[%c24_62, %c0_63] : memref<304x8xf32, #tpu.memory_space<vmem>>, vector<256x3xf32>
      tpu.vector_store %arg8[%c24_62, %c0_63], %104 {strides = array<i32>} : memref<304x8xf32, #tpu.memory_space<vmem>>, vector<256x3xf32>,
      %cst_64 = arith.constant 0.000000e+00 : f32
      %106 = vector.broadcast %cst_64 : f32 to vector<128x128xf32>
      %c0_65 = arith.constant 0 : index
      %c0_66 = arith.constant 0 : index
      %107 = vector.load %arg9[%c0_65, %c0_66] : memref<128x128xf32, #tpu.memory_space<vmem>>, vector<128x128xf32>
      tpu.vector_store %arg9[%c0_65, %c0_66], %106 {strides = array<i32>} : memref<128x128xf32, #tpu.memory_space<vmem>>, vector<128x128xf32>,
    } else {
    }
    %c128_i32 = arith.constant 128 : i32
    %3 = arith.muli %arg1, %c128_i32 : i32
    %4 = tpu.iota {dimensions = array<i32: 0>} : vector<128x8xi32>
    %c16_i32 = arith.constant 16 : i32
    %c0_i32_1 = arith.constant 0 : i32
    %5 = arith.cmpi eq, %c16_i32, %c0_i32_1 : i32
    %c1_i32 = arith.constant 1 : i32
    %6 = arith.select %5, %c1_i32, %c16_i32 : i32
    %7 = vector.broadcast %6 : i32 to vector<128x8xi32>
    %8 = arith.remsi %4, %7 : vector<128x8xi32>
    %c0_i32_2 = arith.constant 0 : i32
    %9 = vector.broadcast %c0_i32_2 : i32 to vector<128x8xi32>
    %10 = arith.cmpi ne, %8, %9 : vector<128x8xi32>
    %c0_i32_3 = arith.constant 0 : i32
    %11 = vector.broadcast %c0_i32_3 : i32 to vector<128x8xi32>
    %12 = arith.cmpi slt, %8, %11 : vector<128x8xi32>
    %c0_i32_4 = arith.constant 0 : i32
    %13 = arith.cmpi slt, %6, %c0_i32_4 : i32
    %14 = vector.broadcast %13 : i1 to vector<128x8xi1>
    %15 = vector.broadcast %14 : vector<128x8xi1> to vector<128x8xi1>
    %16 = arith.xori %12, %15 : vector<128x8xi1>
    %17 = arith.andi %16, %10 : vector<128x8xi1>
    %18 = vector.broadcast %6 : i32 to vector<128x8xi32>
    %19 = arith.addi %8, %18 : vector<128x8xi32>
    %20 = arith.select %17, %19, %8 : vector<128x8xi1>, vector<128x8xi32>
    %c1_i32_5 = arith.constant 1 : i32
    %21 = vector.broadcast %c1_i32_5 : i32 to vector<128x8xi32>
    %22 = arith.cmpi sge, %20, %21 : vector<128x8xi32>
    %c14_i32 = arith.constant 14 : i32
    %23 = vector.broadcast %c14_i32 : i32 to vector<128x8xi32>
    %24 = arith.cmpi sle, %20, %23 : vector<128x8xi32>
    %c24_i32 = arith.constant 24 : i32
    %25 = arith.addi %3, %c24_i32 : i32
    %c-17_i32 = arith.constant -17 : i32
    %26 = arith.addi %25, %c-17_i32 : i32
    %27 = arith.index_cast %26 : i32 to index
    %c0 = arith.constant 0 : index
    %28 = vector.load %arg8[%27, %c0] : memref<304x8xf32, #tpu.memory_space<vmem>>, vector<128x8xf32>
    %cst = arith.constant 0.000000e+00 : f32
    %29 = vector.broadcast %cst : f32 to vector<128x8xf32>
    %30 = arith.select %22, %28, %29 : vector<128x8xi1>, vector<128x8xf32>
    %c0_6 = arith.constant 0 : index
    %c0_7 = arith.constant 0 : index
    %31 = vector.load %arg9[%c0_6, %c0_7] : memref<128x128xf32, #tpu.memory_space<vmem>>, vector<128x8xf32>
    tpu.vector_store %arg9[%c0_6, %c0_7], %30 {strides = array<i32>} : memref<128x128xf32, #tpu.memory_space<vmem>>, vector<128x8xf32>,
    %c24_i32_8 = arith.constant 24 : i32
    %32 = arith.addi %3, %c24_i32_8 : i32
    %c-16_i32 = arith.constant -16 : i32
    %33 = arith.addi %32, %c-16_i32 : i32
    %34 = arith.index_cast %33 : i32 to index
    %c0_9 = arith.constant 0 : index
    %35 = vector.load %arg8[%34, %c0_9] : memref<304x8xf32, #tpu.memory_space<vmem>>, vector<128x8xf32>
    %c0_10 = arith.constant 0 : index
    %c8 = arith.constant 8 : index
    %36 = vector.load %arg9[%c0_10, %c8] : memref<128x128xf32, #tpu.memory_space<vmem>>, vector<128x8xf32>
    tpu.vector_store %arg9[%c0_10, %c8], %35 {strides = array<i32>} : memref<128x128xf32, #tpu.memory_space<vmem>>, vector<128x8xf32>,
    %c24_i32_11 = arith.constant 24 : i32
    %37 = arith.addi %3, %c24_i32_11 : i32
    %c-15_i32 = arith.constant -15 : i32
    %38 = arith.addi %37, %c-15_i32 : i32
    %39 = arith.index_cast %38 : i32 to index
    %c0_12 = arith.constant 0 : index
    %40 = vector.load %arg8[%39, %c0_12] : memref<304x8xf32, #tpu.memory_space<vmem>>, vector<128x8xf32>
    %cst_13 = arith.constant 0.000000e+00 : f32
    %41 = vector.broadcast %cst_13 : f32 to vector<128x8xf32>
    %42 = arith.select %24, %40, %41 : vector<128x8xi1>, vector<128x8xf32>
    %c0_14 = arith.constant 0 : index
    %c16 = arith.constant 16 : index
    %43 = vector.load %arg9[%c0_14, %c16] : memref<128x128xf32, #tpu.memory_space<vmem>>, vector<128x8xf32>
    tpu.vector_store %arg9[%c0_14, %c16], %42 {strides = array<i32>} : memref<128x128xf32, #tpu.memory_space<vmem>>, vector<128x8xf32>,
    %c24_i32_15 = arith.constant 24 : i32
    %44 = arith.addi %3, %c24_i32_15 : i32
    %c-1_i32 = arith.constant -1 : i32
    %45 = arith.addi %44, %c-1_i32 : i32
    %46 = arith.index_cast %45 : i32 to index
    %c0_16 = arith.constant 0 : index
    %47 = vector.load %arg8[%46, %c0_16] : memref<304x8xf32, #tpu.memory_space<vmem>>, vector<128x8xf32>
    %cst_17 = arith.constant 0.000000e+00 : f32
    %48 = vector.broadcast %cst_17 : f32 to vector<128x8xf32>
    %49 = arith.select %22, %47, %48 : vector<128x8xi1>, vector<128x8xf32>
    %c0_18 = arith.constant 0 : index
    %c24 = arith.constant 24 : index
    %50 = vector.load %arg9[%c0_18, %c24] : memref<128x128xf32, #tpu.memory_space<vmem>>, vector<128x8xf32>
    tpu.vector_store %arg9[%c0_18, %c24], %49 {strides = array<i32>} : memref<128x128xf32, #tpu.memory_space<vmem>>, vector<128x8xf32>,
    %c24_i32_19 = arith.constant 24 : i32
    %51 = arith.addi %3, %c24_i32_19 : i32
    %c0_i32_20 = arith.constant 0 : i32
    %52 = arith.addi %51, %c0_i32_20 : i32
    %53 = arith.index_cast %52 : i32 to index
    %c0_21 = arith.constant 0 : index
    %54 = vector.load %arg8[%53, %c0_21] : memref<304x8xf32, #tpu.memory_space<vmem>>, vector<128x8xf32>
    %c0_22 = arith.constant 0 : index
    %c32 = arith.constant 32 : index
    %55 = vector.load %arg9[%c0_22, %c32] : memref<128x128xf32, #tpu.memory_space<vmem>>, vector<128x8xf32>
    tpu.vector_store %arg9[%c0_22, %c32], %54 {strides = array<i32>} : memref<128x128xf32, #tpu.memory_space<vmem>>, vector<128x8xf32>,
    %c24_i32_23 = arith.constant 24 : i32
    %56 = arith.addi %3, %c24_i32_23 : i32
    %c1_i32_24 = arith.constant 1 : i32
    %57 = arith.addi %56, %c1_i32_24 : i32
    %58 = arith.index_cast %57 : i32 to index
    %c0_25 = arith.constant 0 : index
    %59 = vector.load %arg8[%58, %c0_25] : memref<304x8xf32, #tpu.memory_space<vmem>>, vector<128x8xf32>
    %cst_26 = arith.constant 0.000000e+00 : f32
    %60 = vector.broadcast %cst_26 : f32 to vector<128x8xf32>
    %61 = arith.select %24, %59, %60 : vector<128x8xi1>, vector<128x8xf32>
    %c0_27 = arith.constant 0 : index
    %c40 = arith.constant 40 : index
    %62 = vector.load %arg9[%c0_27, %c40] : memref<128x128xf32, #tpu.memory_space<vmem>>, vector<128x8xf32>
    tpu.vector_store %arg9[%c0_27, %c40], %61 {strides = array<i32>} : memref<128x128xf32, #tpu.memory_space<vmem>>, vector<128x8xf32>,
    %c24_i32_28 = arith.constant 24 : i32
    %63 = arith.addi %3, %c24_i32_28 : i32
    %c15_i32 = arith.constant 15 : i32
    %64 = arith.addi %63, %c15_i32 : i32
    %65 = arith.index_cast %64 : i32 to index
    %c0_29 = arith.constant 0 : index
    %66 = vector.load %arg8[%65, %c0_29] : memref<304x8xf32, #tpu.memory_space<vmem>>, vector<128x8xf32>
    %cst_30 = arith.constant 0.000000e+00 : f32
    %67 = vector.broadcast %cst_30 : f32 to vector<128x8xf32>
    %68 = arith.select %22, %66, %67 : vector<128x8xi1>, vector<128x8xf32>
    %c0_31 = arith.constant 0 : index
    %c48 = arith.constant 48 : index
    %69 = vector.load %arg9[%c0_31, %c48] : memref<128x128xf32, #tpu.memory_space<vmem>>, vector<128x8xf32>
    tpu.vector_store %arg9[%c0_31, %c48], %68 {strides = array<i32>} : memref<128x128xf32, #tpu.memory_space<vmem>>, vector<128x8xf32>,
    %c24_i32_32 = arith.constant 24 : i32
    %70 = arith.addi %3, %c24_i32_32 : i32
    %c16_i32_33 = arith.constant 16 : i32
    %71 = arith.addi %70, %c16_i32_33 : i32
    %72 = arith.index_cast %71 : i32 to index
    %c0_34 = arith.constant 0 : index
    %73 = vector.load %arg8[%72, %c0_34] : memref<304x8xf32, #tpu.memory_space<vmem>>, vector<128x8xf32>
    %c0_35 = arith.constant 0 : index
    %c56 = arith.constant 56 : index
    %74 = vector.load %arg9[%c0_35, %c56] : memref<128x128xf32, #tpu.memory_space<vmem>>, vector<128x8xf32>
    tpu.vector_store %arg9[%c0_35, %c56], %73 {strides = array<i32>} : memref<128x128xf32, #tpu.memory_space<vmem>>, vector<128x8xf32>,
    %c24_i32_36 = arith.constant 24 : i32
    %75 = arith.addi %3, %c24_i32_36 : i32
    %c17_i32 = arith.constant 17 : i32
    %76 = arith.addi %75, %c17_i32 : i32
    %77 = arith.index_cast %76 : i32 to index
    %c0_37 = arith.constant 0 : index
    %78 = vector.load %arg8[%77, %c0_37] : memref<304x8xf32, #tpu.memory_space<vmem>>, vector<128x8xf32>
    %cst_38 = arith.constant 0.000000e+00 : f32
    %79 = vector.broadcast %cst_38 : f32 to vector<128x8xf32>
    %80 = arith.select %24, %78, %79 : vector<128x8xi1>, vector<128x8xf32>
    %c0_39 = arith.constant 0 : index
    %c64 = arith.constant 64 : index
    %81 = vector.load %arg9[%c0_39, %c64] : memref<128x128xf32, #tpu.memory_space<vmem>>, vector<128x8xf32>
    tpu.vector_store %arg9[%c0_39, %c64], %80 {strides = array<i32>} : memref<128x128xf32, #tpu.memory_space<vmem>>, vector<128x8xf32>,
    %c0_40 = arith.constant 0 : index
    %c0_41 = arith.constant 0 : index
    %82 = vector.load %arg9[%c0_40, %c0_41] : memref<128x128xf32, #tpu.memory_space<vmem>>, vector<128x128xf32>
    %c0_42 = arith.constant 0 : index
    %c0_43 = arith.constant 0 : index
    %83 = vector.load %arg3[%c0_42, %c0_43] : memref<128x32xf32, #tpu.memory_space<vmem>>, vector<128x32xf32>
    %cst_44 = arith.constant dense<0.000000e+00> : vector<128x32xf32>
    %84 = tpu.matmul %82, %83, %cst_44 {dimension_numbers = #tpu.dot_dimension_numbers<[1], [0], [0], [1], [0, 0, 1, 1], [], []>} : vector<128x128xf32>, vector<128x32xf32>, vector<128x32xf32> -> vector<128x32xf32>
    %c0_45 = arith.constant 0 : index
    %c0_46 = arith.constant 0 : index
    %85 = vector.load %arg4[%c0_45, %c0_46] : memref<1x32xf32, #tpu.memory_space<vmem>>, vector<1x32xf32>
    %86 = vector.broadcast %85 : vector<1x32xf32> to vector<128x32xf32>
    %87 = arith.addf %84, %86 : vector<128x32xf32>
    %88 = arith.negf %87 : vector<128x32xf32>
    %89 = math.exp %88 : vector<128x32xf32>
    %cst_47 = arith.constant 1.000000e+00 : f32
    %90 = vector.broadcast %cst_47 : f32 to vector<128x32xf32>
    %91 = arith.addf %90, %89 : vector<128x32xf32>
    %92 = arith.divf %90, %91 : vector<128x32xf32>
    %93 = arith.mulf %87, %92 : vector<128x32xf32>
    %c0_48 = arith.constant 0 : index
    %c0_49 = arith.constant 0 : index
    %94 = vector.load %arg5[%c0_48, %c0_49] : memref<32x128xf32, #tpu.memory_space<vmem>>, vector<32x128xf32>
    %cst_50 = arith.constant dense<0.000000e+00> : vector<128x128xf32>
    %95 = tpu.matmul %93, %94, %cst_50 {dimension_numbers = #tpu.dot_dimension_numbers<[1], [0], [0], [1], [0, 0, 1, 1], [], []>} : vector<128x32xf32>, vector<32x128xf32>, vector<128x128xf32> -> vector<128x128xf32>
    %c0_51 = arith.constant 0 : index
    %c0_52 = arith.constant 0 : index
    %96 = vector.load %arg6[%c0_51, %c0_52] : memref<1x128xf32, #tpu.memory_space<vmem>>, vector<1x128xf32>
    %97 = vector.broadcast %96 : vector<1x128xf32> to vector<128x128xf32>
    %98 = arith.addf %95, %97 : vector<128x128xf32>
    %99 = vector.shape_cast %98 : vector<128x128xf32> to vector<1x128x128xf32>
    %c0_53 = arith.constant 0 : index
    %c0_54 = arith.constant 0 : index
    %c0_55 = arith.constant 0 : index
    %100 = vector.load %arg7[%c0_53, %c0_54, %c0_55] : memref<1x128x128xf32, #tpu.memory_space<vmem>>, vector<1x128x128xf32>
    tpu.vector_store %arg7[%c0_53, %c0_54, %c0_55], %99 {strides = array<i32>} : memref<1x128x128xf32, #tpu.memory_space<vmem>>, vector<1x128x128xf32>,
    return
  }
  func.func @transform_0(%arg0: i32, %arg1: i32) -> (i32, i32, i32) {
    %c0_i32 = arith.constant 0 : i32
    %c0_i32_0 = arith.constant 0 : i32
    %c0_i32_1 = arith.constant 0 : i32
    return %arg0, %c0_i32, %c0_i32_0 : i32, i32, i32
  }
  func.func @transform_1(%arg0: i32, %arg1: i32) -> (i32, i32) {
    %c0_i32 = arith.constant 0 : i32
    %c0_i32_0 = arith.constant 0 : i32
    %c0_i32_1 = arith.constant 0 : i32
    return %c0_i32, %c0_i32_0 : i32, i32
  }
  func.func @transform_2(%arg0: i32, %arg1: i32) -> (i32, i32) {
    %c0_i32 = arith.constant 0 : i32
    %c0_i32_0 = arith.constant 0 : i32
    %c0_i32_1 = arith.constant 0 : i32
    return %c0_i32, %c0_i32_0 : i32, i32
  }
  func.func @transform_3(%arg0: i32, %arg1: i32) -> (i32, i32) {
    %c0_i32 = arith.constant 0 : i32
    %c0_i32_0 = arith.constant 0 : i32
    %c0_i32_1 = arith.constant 0 : i32
    return %c0_i32, %c0_i32_0 : i32, i32
  }
  func.func @transform_4(%arg0: i32, %arg1: i32) -> (i32, i32) {
    %c0_i32 = arith.constant 0 : i32
    %c0_i32_0 = arith.constant 0 : i32
    %c0_i32_1 = arith.constant 0 : i32
    return %c0_i32, %c0_i32_0 : i32, i32
  }
  func.func @transform_5(%arg0: i32, %arg1: i32) -> (i32, i32, i32) {
    %c0_i32 = arith.constant 0 : i32
    %c0_i32_0 = arith.constant 0 : i32
    return %arg0, %arg1, %c0_i32 : i32, i32, i32
  }
}

</mosaic_0001>

<llo_original>
// kernel: tpu_custom_call.1
$region0: #{tpu_custom_call.1}
  #allocation0 [shape = 'u32[]', space=smem, size = 0x4, offset = 0x4, fixed_abs, tag = 'smem constant byte address 0x4 - core index']
  #allocation1 [shape = 'u32[144,128]{1,0:T(1,128)}', space=vmem, size = 0x12000, scoped, tag = 'internal scratch']
  #allocation2 [shape = 'f32[304,8]{1,0:T(8,128)}', space=vmem, size = 0x26000, scoped, tag = 'scratch operand']
  #allocation3 [shape = 'f32[128,128]{1,0:T(8,128)}', space=vmem, size = 0x10000, scoped, tag = 'scratch operand']
  %s0 = inlined_call_operand.vmem [shape: f32[2,256,3], index: 0, kind: input, shape index: {}]
  %s1 = inlined_call_operand.vmem [shape: f32[128,32], index: 1, kind: input, shape index: {}]
  %s2 = inlined_call_operand.vmem [shape: f32[1,32], index: 2, kind: input, shape index: {}]
  %s3 = inlined_call_operand.vmem [shape: f32[32,128], index: 3, kind: input, shape index: {}]
  %s4 = inlined_call_operand.vmem [shape: f32[1,128], index: 4, kind: input, shape index: {}]
  %s5 = inlined_call_operand.hbm [shape: f32[2,256,128], index: 5, kind: output, shape index: {}]
  %s6 = sld [smem:[#allocation0]]
  $region57: #{tpu_custom_call.1} parent=0
    _
  %s8 = ssub.s32 1, %s6
  %s9 = scalar_select 0, %s8, %s6
  $region1: #{tpu_custom_call.1} parent=0
    #allocation4 [shape = 'u8[131072]{0}', space=vmem, size = 0x20000, scoped, tag = 'output window, operand 0']
    #allocation5 [shape = 's32[2]{0}', space=sflag, size = 0x8, scoped, tag = 'scoped memory for tpu_custom_call.1']
    %10 = vsyncpa [#allocation5], 0
    %s11 = scalar_lea.sflag [#allocation5], 1
    %12 = vsyncpa %s11, 0
    loop: start=0, step=1, limit=6
    $region2: #{tpu_custom_call.1} parent=1 // loop_pre_header
      _
    $region3: #{tpu_custom_call.1} parent=1 // loop_header
      %s14 = sphi 0, %s18
      %p15 = scmp.ge.s32.totalorder %s14, 6
      %s21 = sphi 0, %s33
      %s22 = sphi 0, %s29
      %s23 = sphi 0, %s21
      %s24 = sphi 0, %s22
      %s25 = sphi 0, %s23
      %s26 = sphi 0, %s24
      %s36 = sphi 0, %s38
      %s39 = sphi 0, %s36
      %s40 = sphi 0, %s39
      %s56 = sphi 0, %s40
      %s60 = sphi 0, %s60
      %s62 = sphi 0, %s60
      %s63 = sphi 0, %s62
      %s77 = sphi 0, %s63
      %s81 = sphi 0, %s81
      %s83 = sphi 0, %s81
      %s84 = sphi 0, %s83
      %s98 = sphi 0, %s84
      %s102 = sphi 0, %s102
      %s104 = sphi 0, %s102
      %s105 = sphi 0, %s104
      %s119 = sphi 0, %s105
      %s123 = sphi 0, %s123
      %s125 = sphi 0, %s123
      %s126 = sphi 0, %s125
      %s140 = sphi 0, %s126
      %s148 = sphi 0, %s150
      %s151 = sphi 0, %s148
      %s152 = sphi 0, %s151
      %s168 = sphi 0, %s152
    $region4: #{tpu_custom_call.1} parent=1 // loop_header_branch
      %17 = sbr.rel (%p15) target = $region8
    $region5: #{tpu_custom_call.1} parent=1 // loop_body
      %s19 = ssub.s32 %s14, 1
      %s20 = ssub.s32 %s14, 2
      %s27 = sadd.s32 1, %s22
      %p28 = scmp.ge.s32.totalorder %s27, 2
      %s29 = scalar_select %p28, 0, %s27
      %s30 = sadd.s32 1, %s21
      %s31 = scalar_select %p28, %s30, %s21
      %p32 = scmp.ge.s32.totalorder %s31, 2
      %s33 = scalar_select %p32, 0, %s31
      %s34 = ssub.s32 %s21, %s33
      %p35 = scmp.eq.s32.totalorder %s34, 0
      %s37 = sadd.s32 %s36, 1
      %s38 = scalar_select %p35, %s36, %s37
      %p41 = pneg %p35
      %p42 = scmp.eq.s32.totalorder %s14, 3
      %p43 = por %p41, %p42
      %p44 = scmp.ne.s32.totalorder %s36, %s39
      %p45 = scmp.eq.s32.totalorder %s14, 0
      %p46 = por %p44, %p45
      %p47 = scmp.ne.s32.totalorder %s36, %s39
      %p48 = scmp.eq.s32.totalorder %s19, 3
      %p49 = por %p47, %p48
      %p50 = scmp.ne.s32.totalorder %s39, %s40
      %p51 = scmp.eq.s32.totalorder %s19, 0
      %p52 = por %p50, %p51
      %p53 = scmp.ne.s32.totalorder %s39, %s40
      %p54 = scmp.eq.s32.totalorder %s20, 3
      %p55 = por %p53, %p54
      %p57 = scmp.ne.s32.totalorder %s40, %s56
      %p58 = scmp.eq.s32.totalorder %s20, 0
      %p59 = por %p57, %p58
      %s61 = sadd.s32 %s60, 1
      %p64 = scmp.eq.s32.totalorder %s14, 3
      %p65 = scmp.ne.s32.totalorder %s60, %s62
      %p66 = scmp.eq.s32.totalorder %s14, 0
      %p67 = por %p65, %p66
      %p68 = scmp.ne.s32.totalorder %s60, %s62
      %p69 = scmp.eq.s32.totalorder %s19, 3
      %p70 = por %p68, %p69
      %p71 = scmp.ne.s32.totalorder %s62, %s63
      %p72 = scmp.eq.s32.totalorder %s19, 0
      %p73 = por %p71, %p72
      %p74 = scmp.ne.s32.totalorder %s62, %s63
      %p75 = scmp.eq.s32.totalorder %s20, 3
      %p76 = por %p74, %p75
      %p78 = scmp.ne.s32.totalorder %s63, %s77
      %p79 = scmp.eq.s32.totalorder %s20, 0
      %p80 = por %p78, %p79
      %s82 = sadd.s32 %s81, 1
      %p85 = scmp.eq.s32.totalorder %s14, 3
      %p86 = scmp.ne.s32.totalorder %s81, %s83
      %p87 = scmp.eq.s32.totalorder %s14, 0
      %p88 = por %p86, %p87
      %p89 = scmp.ne.s32.totalorder %s81, %s83
      %p90 = scmp.eq.s32.totalorder %s19, 3
      %p91 = por %p89, %p90
      %p92 = scmp.ne.s32.totalorder %s83, %s84
      %p93 = scmp.eq.s32.totalorder %s19, 0
      %p94 = por %p92, %p93
      %p95 = scmp.ne.s32.totalorder %s83, %s84
      %p96 = scmp.eq.s32.totalorder %s20, 3
      %p97 = por %p95, %p96
      %p99 = scmp.ne.s32.totalorder %s84, %s98
      %p100 = scmp.eq.s32.totalorder %s20, 0
      %p101 = por %p99, %p100
      %s103 = sadd.s32 %s102, 1
      %p106 = scmp.eq.s32.totalorder %s14, 3
      %p107 = scmp.ne.s32.totalorder %s102, %s104
      %p108 = scmp.eq.s32.totalorder %s14, 0
      %p109 = por %p107, %p108
      %p110 = scmp.ne.s32.totalorder %s102, %s104
      %p111 = scmp.eq.s32.totalorder %s19, 3
      %p112 = por %p110, %p111
      %p113 = scmp.ne.s32.totalorder %s104, %s105
      %p114 = scmp.eq.s32.totalorder %s19, 0
      %p115 = por %p113, %p114
      %p116 = scmp.ne.s32.totalorder %s104, %s105
      %p117 = scmp.eq.s32.totalorder %s20, 3
      %p118 = por %p116, %p117
      %p120 = scmp.ne.s32.totalorder %s105, %s119
      %p121 = scmp.eq.s32.totalorder %s20, 0
      %p122 = por %p120, %p121
      %s124 = sadd.s32 %s123, 1
      %p127 = scmp.eq.s32.totalorder %s14, 3
      %p128 = scmp.ne.s32.totalorder %s123, %s125
      %p129 = scmp.eq.s32.totalorder %s14, 0
      %p130 = por %p128, %p129
      %p131 = scmp.ne.s32.totalorder %s123, %s125
      %p132 = scmp.eq.s32.totalorder %s19, 3
      %p133 = por %p131, %p132
      %p134 = scmp.ne.s32.totalorder %s125, %s126
      %p135 = scmp.eq.s32.totalorder %s19, 0
      %p136 = por %p134, %p135
      %p137 = scmp.ne.s32.totalorder %s125, %s126
      %p138 = scmp.eq.s32.totalorder %s20, 3
      %p139 = por %p137, %p138
      %p141 = scmp.ne.s32.totalorder %s126, %s140
      %p142 = scmp.eq.s32.totalorder %s20, 0
      %p143 = por %p141, %p142
      %s144 = ssub.s32 %s21, %s33
      %s145 = ssub.s32 %s22, %s29
      %s146 = sor.u32 %s144, %s145
      %p147 = scmp.eq.s32.totalorder %s146, 0
      %s149 = sadd.s32 %s148, 1
      %s150 = scalar_select %p147, %s148, %s149
      %p153 = pneg %p147
      %p154 = scmp.eq.s32.totalorder %s14, 3
      %p155 = por %p153, %p154
      %p156 = scmp.ne.s32.totalorder %s148, %s151
      %p157 = scmp.eq.s32.totalorder %s14, 0
      %p158 = por %p156, %p157
      %p159 = scmp.ne.s32.totalorder %s148, %s151
      %p160 = scmp.eq.s32.totalorder %s19, 3
      %p161 = por %p159, %p160
      %p162 = scmp.ne.s32.totalorder %s151, %s152
      %p163 = scmp.eq.s32.totalorder %s19, 0
      %p164 = por %p162, %p163
      %p165 = scmp.ne.s32.totalorder %s151, %s152
      %p166 = scmp.eq.s32.totalorder %s20, 3
      %p167 = por %p165, %p166
      %p169 = scmp.ne.s32.totalorder %s152, %s168
      %p170 = scmp.eq.s32.totalorder %s20, 0
      %p171 = por %p169, %p170
      %p172 = scmp.le.s32.totalorder 1, %s14
      %p173 = scmp.lt.s32.totalorder %s14, 5
      %p174 = pnand %p172, %p173
      %p175 = pneg %p174
      // Predicated region
      $region9: #{tpu_custom_call.1} parent=5 // pred_check
        _
      $region10: #{tpu_custom_call.1} parent=5 // pred_check_branch
        %177 = sbr.rel (%p174) target = $region12
      $region11: #{tpu_custom_call.1} parent=5 // pred_region
        %s178 = ssub.s32 %s14, 1
        // Predicated region
        $region13: #{tpu_custom_call.1} parent=11 // pred_check
          %p179 = pneg %p73
        $region14: #{tpu_custom_call.1} parent=11 // pred_check_branch
          %181 = sbr.rel (%p179) target = $region16
        $region15: #{tpu_custom_call.1} parent=11 // pred_region
          _
        $region16: #{tpu_custom_call.1} parent=11 // pred_fallthru
          _
        // Predicated region
        $region17: #{tpu_custom_call.1} parent=11 // pred_check
          %p182 = pneg %p94
        $region18: #{tpu_custom_call.1} parent=11 // pred_check_branch
          %184 = sbr.rel (%p182) target = $region20
        $region19: #{tpu_custom_call.1} parent=11 // pred_region
          _
        $region20: #{tpu_custom_call.1} parent=11 // pred_fallthru
          _
        // Predicated region
        $region21: #{tpu_custom_call.1} parent=11 // pred_check
          %p185 = pneg %p115
        $region22: #{tpu_custom_call.1} parent=11 // pred_check_branch
          %187 = sbr.rel (%p185) target = $region24
        $region23: #{tpu_custom_call.1} parent=11 // pred_region
          _
        $region24: #{tpu_custom_call.1} parent=11 // pred_fallthru
          _
        // Predicated region
        $region25: #{tpu_custom_call.1} parent=11 // pred_check
          %p188 = pneg %p136
        $region26: #{tpu_custom_call.1} parent=11 // pred_check_branch
          %190 = sbr.rel (%p188) target = $region28
        $region27: #{tpu_custom_call.1} parent=11 // pred_region
          _
        $region28: #{tpu_custom_call.1} parent=11 // pred_fallthru
          _
      $region12: #{tpu_custom_call.1} parent=5 // pred_fallthru
        _
      %p191 = scmp.lt.s32.totalorder %s14, 4
      // Predicated region
      $region29: #{tpu_custom_call.1} parent=5 // pred_check
        %p192 = pneg %p191
      $region30: #{tpu_custom_call.1} parent=5 // pred_check_branch
        %194 = sbr.rel (%p192) target = $region32
      $region31: #{tpu_custom_call.1} parent=5 // pred_region
        // Predicated region
        $region33: #{tpu_custom_call.1} parent=31 // pred_check
          %p195 = pneg %p46
        $region34: #{tpu_custom_call.1} parent=31 // pred_check_branch
          %197 = sbr.rel (%p195) target = $region36
        $region35: #{tpu_custom_call.1} parent=31 // pred_region
          %p198 = scmp.lt.s32.totalorder %s21, 1
          %s199 = scalar_select %p198, %s21, 1
          %s200 = smul.addr %s199, 32
          %s201 = smul.addr %s200, 8
          %s202 = scalar_lea.vmem %s0, %s201
        $region36: #{tpu_custom_call.1} parent=31 // pred_fallthru
          _
      $region32: #{tpu_custom_call.1} parent=5 // pred_fallthru
        _
      %p203 = scmp.le.s32.totalorder 1, %s14
      %p204 = scmp.lt.s32.totalorder %s14, 5
      %p205 = pnand %p203, %p204
      %p206 = pneg %p205
      // Predicated region
      $region37: #{tpu_custom_call.1} parent=5 // pred_check
        _
      $region38: #{tpu_custom_call.1} parent=5 // pred_check_branch
        %208 = sbr.rel (%p205) target = $region40
      $region39: #{tpu_custom_call.1} parent=5 // pred_region
        %s209 = ssub.s32 %s14, 1
        %p210 = scmp.lt.s32.totalorder %s23, 1
        %s211 = scalar_select %p210, %s23, 1
        %s212 = smul.addr %s211, 32
        %s213 = smul.addr %s212, 8
        %s214 = scalar_lea.vmem %s0, %s213
        %p215 = pneg %p52
        %p216 = pneg %p49
        %p217 = pneg %p73
        %p218 = pneg %p70
        %p219 = pneg %p94
        %p220 = pneg %p91
        %p221 = pneg %p115
        %p222 = pneg %p112
        %p223 = pneg %p136
        %p224 = pneg %p133
        %p225 = pneg %p164
        %p226 = pneg %p161
        %s227 = sand.u32 %s151, 1
        %s228 = scalar_lea.sflag [#allocation5], %s227
        %s229 = sand.u32 %s151, 1
        %s230 = smul.addr %s229, 128
        %s231 = scalar_lea.vmem [#allocation4], %s230
        %p232 = scmp.lt.s32.totalorder %s23, 1
        %s233 = scalar_select %p232, %s23, 1
        %s234 = smul.addr %s233, 32
        %s235 = smul.addr %s234, 8
        %s236 = scalar_lea.vmem %s0, %s235
        %s237 = smul.u32 16, %s24
        %p238 = scmp.eq.s32.totalorder %s24, 0
        // Predicated region
        $region41: #{tpu_custom_call.1} parent=39 // pred_check
          %p239 = pneg %p238
        $region42: #{tpu_custom_call.1} parent=39 // pred_check_branch
          %241 = sbr.rel (%p239) target = $region44
        $region43: #{tpu_custom_call.1} parent=39 // pred_region
          %vm242 = vcmask 64512
          %243 = vst.msk [vmem:[#allocation2] sm:$0xff] %vm242, 0.0
          %244 = vst.msk [vmem:[#allocation2 + $0x8] sm:$0xff] %vm242, 0.0
          %245 = vst.msk [vmem:[#allocation2 + $0x10] sm:$0xff] %vm242, 0.0
          %246 = vst.msk [vmem:[#allocation2 + $0x18] sm:$0xff] %vm242, 0.0
          %247 = vst.msk [vmem:[#allocation2 + $0x20] sm:$0xff] %vm242, 0.0
          %248 = vst.msk [vmem:[#allocation2 + $0x28] sm:$0xff] %vm242, 0.0
          %249 = vst.msk [vmem:[#allocation2 + $0x30] sm:$0xff] %vm242, 0.0
          %250 = vst.msk [vmem:[#allocation2 + $0x38] sm:$0xff] %vm242, 0.0
          %251 = vst.msk [vmem:[#allocation2 + $0x40] sm:$0xff] %vm242, 0.0
          %252 = vst.msk [vmem:[#allocation2 + $0x48] sm:$0xff] %vm242, 0.0
          %253 = vst.msk [vmem:[#allocation2 + $0x50] sm:$0xff] %vm242, 0.0
          %254 = vst.msk [vmem:[#allocation2 + $0x58] sm:$0xff] %vm242, 0.0
          %255 = vst.msk [vmem:[#allocation2 + $0x60] sm:$0xff] %vm242, 0.0
          %256 = vst.msk [vmem:[#allocation2 + $0x68] sm:$0xff] %vm242, 0.0
          %257 = vst.msk [vmem:[#allocation2 + $0x70] sm:$0xff] %vm242, 0.0
          %258 = vst.msk [vmem:[#allocation2 + $0x78] sm:$0xff] %vm242, 0.0
          %259 = vst.msk [vmem:[#allocation2 + $0x80] sm:$0xff] %vm242, 0.0
          %260 = vst.msk [vmem:[#allocation2 + $0x88] sm:$0xff] %vm242, 0.0
          %261 = vst.msk [vmem:[#allocation2 + $0x90] sm:$0xff] %vm242, 0.0
          %262 = vst.msk [vmem:[#allocation2 + $0x98] sm:$0xff] %vm242, 0.0
          %263 = vst.msk [vmem:[#allocation2 + $0xa0] sm:$0xff] %vm242, 0.0
          %264 = vst.msk [vmem:[#allocation2 + $0xa8] sm:$0xff] %vm242, 0.0
          %265 = vst.msk [vmem:[#allocation2 + $0xb0] sm:$0xff] %vm242, 0.0
          %266 = vst.msk [vmem:[#allocation2 + $0xb8] sm:$0xff] %vm242, 0.0
          %267 = vst.msk [vmem:[#allocation2 + $0xc0] sm:$0xff] %vm242, 0.0
          %268 = vst.msk [vmem:[#allocation2 + $0xc8] sm:$0xff] %vm242, 0.0
          %269 = vst.msk [vmem:[#allocation2 + $0xd0] sm:$0xff] %vm242, 0.0
          %270 = vst.msk [vmem:[#allocation2 + $0xd8] sm:$0xff] %vm242, 0.0
          %271 = vst.msk [vmem:[#allocation2 + $0xe0] sm:$0xff] %vm242, 0.0
          %272 = vst.msk [vmem:[#allocation2 + $0xe8] sm:$0xff] %vm242, 0.0
          %273 = vst.msk [vmem:[#allocation2 + $0xf0] sm:$0xff] %vm242, 0.0
          %274 = vst.msk [vmem:[#allocation2 + $0xf8] sm:$0xff] %vm242, 0.0
          %275 = vst.msk [vmem:[#allocation2 + $0x100] sm:$0xff] %vm242, 0.0
          %276 = vst.msk [vmem:[#allocation2 + $0x108] sm:$0xff] %vm242, 0.0
          %277 = vst.msk [vmem:[#allocation2 + $0x110] sm:$0xff] %vm242, 0.0
          %278 = vst.msk [vmem:[#allocation2 + $0x118] sm:$0xff] %vm242, 0.0
          %279 = vst.msk [vmem:[#allocation2 + $0x120] sm:$0xff] %vm242, 0.0
          %280 = vst.msk [vmem:[#allocation2 + $0x128] sm:$0xff] %vm242, 0.0
          %v281 = vld [vmem:[%s236] sm:$0xff]
          %v282 = vld [vmem:[%s236 + $0x8] sm:$0xff]
          %v283 = vld [vmem:[%s236 + $0x10] sm:$0xff]
          %v284 = vld [vmem:[%s236 + $0x18] sm:$0xff]
          %v285 = vld [vmem:[%s236 + $0x20] sm:$0xff]
          %v286 = vld [vmem:[%s236 + $0x28] sm:$0xff]
          %v287 = vld [vmem:[%s236 + $0x30] sm:$0xff]
          %v288 = vld [vmem:[%s236 + $0x38] sm:$0xff]
          %v289 = vld [vmem:[%s236 + $0x40] sm:$0xff]
          %v290 = vld [vmem:[%s236 + $0x48] sm:$0xff]
          %v291 = vld [vmem:[%s236 + $0x50] sm:$0xff]
          %v292 = vld [vmem:[%s236 + $0x58] sm:$0xff]
          %v293 = vld [vmem:[%s236 + $0x60] sm:$0xff]
          %v294 = vld [vmem:[%s236 + $0x68] sm:$0xff]
          %v295 = vld [vmem:[%s236 + $0x70] sm:$0xff]
          %v296 = vld [vmem:[%s236 + $0x78] sm:$0xff]
          %v297 = vld [vmem:[%s236 + $0x80] sm:$0xff]
          %v298 = vld [vmem:[%s236 + $0x88] sm:$0xff]
          %v299 = vld [vmem:[%s236 + $0x90] sm:$0xff]
          %v300 = vld [vmem:[%s236 + $0x98] sm:$0xff]
          %v301 = vld [vmem:[%s236 + $0xa0] sm:$0xff]
          %v302 = vld [vmem:[%s236 + $0xa8] sm:$0xff]
          %v303 = vld [vmem:[%s236 + $0xb0] sm:$0xff]
          %v304 = vld [vmem:[%s236 + $0xb8] sm:$0xff]
          %v305 = vld [vmem:[%s236 + $0xc0] sm:$0xff]
          %v306 = vld [vmem:[%s236 + $0xc8] sm:$0xff]
          %v307 = vld [vmem:[%s236 + $0xd0] sm:$0xff]
          %v308 = vld [vmem:[%s236 + $0xd8] sm:$0xff]
          %v309 = vld [vmem:[%s236 + $0xe0] sm:$0xff]
          %v310 = vld [vmem:[%s236 + $0xe8] sm:$0xff]
          %v311 = vld [vmem:[%s236 + $0xf0] sm:$0xff]
          %v312 = vld [vmem:[%s236 + $0xf8] sm:$0xff]
          %vm313 = vcmask 23552
          %314 = vst.msk [vmem:[#allocation2 + $0x18] sm:$0xff] %vm313, %v281
          %315 = vst.msk [vmem:[#allocation2 + $0x20] sm:$0xff] %vm313, %v282
          %316 = vst.msk [vmem:[#allocation2 + $0x28] sm:$0xff] %vm313, %v283
          %317 = vst.msk [vmem:[#allocation2 + $0x30] sm:$0xff] %vm313, %v284
          %318 = vst.msk [vmem:[#allocation2 + $0x38] sm:$0xff] %vm313, %v285
          %319 = vst.msk [vmem:[#allocation2 + $0x40] sm:$0xff] %vm313, %v286
          %320 = vst.msk [vmem:[#allocation2 + $0x48] sm:$0xff] %vm313, %v287
          %321 = vst.msk [vmem:[#allocation2 + $0x50] sm:$0xff] %vm313, %v288
          %322 = vst.msk [vmem:[#allocation2 + $0x58] sm:$0xff] %vm313, %v289
          %323 = vst.msk [vmem:[#allocation2 + $0x60] sm:$0xff] %vm313, %v290
          %324 = vst.msk [vmem:[#allocation2 + $0x68] sm:$0xff] %vm313, %v291
          %325 = vst.msk [vmem:[#allocation2 + $0x70] sm:$0xff] %vm313, %v292
          %326 = vst.msk [vmem:[#allocation2 + $0x78] sm:$0xff] %vm313, %v293
          %327 = vst.msk [vmem:[#allocation2 + $0x80] sm:$0xff] %vm313, %v294
          %328 = vst.msk [vmem:[#allocation2 + $0x88] sm:$0xff] %vm313, %v295
          %329 = vst.msk [vmem:[#allocation2 + $0x90] sm:$0xff] %vm313, %v296
          %330 = vst.msk [vmem:[#allocation2 + $0x98] sm:$0xff] %vm313, %v297
          %331 = vst.msk [vmem:[#allocation2 + $0xa0] sm:$0xff] %vm313, %v298
          %332 = vst.msk [vmem:[#allocation2 + $0xa8] sm:$0xff] %vm313, %v299
          %333 = vst.msk [vmem:[#allocation2 + $0xb0] sm:$0xff] %vm313, %v300
          %334 = vst.msk [vmem:[#allocation2 + $0xb8] sm:$0xff] %vm313, %v301
          %335 = vst.msk [vmem:[#allocation2 + $0xc0] sm:$0xff] %vm313, %v302
          %336 = vst.msk [vmem:[#allocation2 + $0xc8] sm:$0xff] %vm313, %v303
          %337 = vst.msk [vmem:[#allocation2 + $0xd0] sm:$0xff] %vm313, %v304
          %338 = vst.msk [vmem:[#allocation2 + $0xd8] sm:$0xff] %vm313, %v305
          %339 = vst.msk [vmem:[#allocation2 + $0xe0] sm:$0xff] %vm313, %v306
          %340 = vst.msk [vmem:[#allocation2 + $0xe8] sm:$0xff] %vm313, %v307
          %341 = vst.msk [vmem:[#allocation2 + $0xf0] sm:$0xff] %vm313, %v308
          %342 = vst.msk [vmem:[#allocation2 + $0xf8] sm:$0xff] %vm313, %v309
          %343 = vst.msk [vmem:[#allocation2 + $0x100] sm:$0xff] %vm313, %v310
          %344 = vst.msk [vmem:[#allocation2 + $0x108] sm:$0xff] %vm313, %v311
          %345 = vst.msk [vmem:[#allocation2 + $0x110] sm:$0xff] %vm313, %v312
          %346 = vst [vmem:[#allocation3] sm:$0xff] 0.0
          %347 = vst [vmem:[#allocation3 + $0x8] sm:$0xff] 0.0
          %348 = vst [vmem:[#allocation3 + $0x10] sm:$0xff] 0.0
          %349 = vst [vmem:[#allocation3 + $0x18] sm:$0xff] 0.0
          %350 = vst [vmem:[#allocation3 + $0x20] sm:$0xff] 0.0
          %351 = vst [vmem:[#allocation3 + $0x28] sm:$0xff] 0.0
          %352 = vst [vmem:[#allocation3 + $0x30] sm:$0xff] 0.0
          %353 = vst [vmem:[#allocation3 + $0x38] sm:$0xff] 0.0
          %354 = vst [vmem:[#allocation3 + $0x40] sm:$0xff] 0.0
          %355 = vst [vmem:[#allocation3 + $0x48] sm:$0xff] 0.0
          %356 = vst [vmem:[#allocation3 + $0x50] sm:$0xff] 0.0
          %357 = vst [vmem:[#allocation3 + $0x58] sm:$0xff] 0.0
          %358 = vst [vmem:[#allocation3 + $0x60] sm:$0xff] 0.0
          %359 = vst [vmem:[#allocation3 + $0x68] sm:$0xff] 0.0
          %360 = vst [vmem:[#allocation3 + $0x70] sm:$0xff] 0.0
          %361 = vst [vmem:[#allocation3 + $0x78] sm:$0xff] 0.0
        $region44: #{tpu_custom_call.1} parent=39 // pred_fallthru
          _
        %s362 = smul.u32 %s24, 128
        %v363 = vlaneseq
        %v364 = vshrl.u32 %v363, 7
        %v365 = vadd.s32 %v364, 8
        %v366 = vadd.s32 %v364, 16
        %v367 = vadd.s32 %v364, 24
        %v368 = vadd.s32 %v364, 32
        %v369 = vadd.s32 %v364, 40
        %v370 = vadd.s32 %v364, 48
        %v371 = vadd.s32 %v364, 56
        %v372 = vadd.s32 %v364, 64
        %v373 = vadd.s32 %v364, 72
        %v374 = vadd.s32 %v364, 80
        %v375 = vadd.s32 %v364, 88
        %v376 = vadd.s32 %v364, 96
        %v377 = vadd.s32 %v364, 104
        %v378 = vadd.s32 %v364, 112
        %v379 = vadd.s32 %v364, 120
        %vm380 = vcmp.lt.s32.totalorder %v364, 0
        %v381 = vsub.s32 0, %v364
        %v382 = vsel %vm380, %v381, %v364
        %v383 = vshrl.u32 %v382, 4
        %v384 = vand.u32 %v382, 15
        %v385 = vsub.s32 0, %v384
        %v386 = vsel %vm380, %v385, %v384
        %vm387 = vcmp.lt.s32.totalorder %v365, 0
        %v388 = vsub.s32 0, %v365
        %v389 = vsel %vm387, %v388, %v365
        %v390 = vshrl.u32 %v389, 4
        %v391 = vand.u32 %v389, 15
        %v392 = vsub.s32 0, %v391
        %v393 = vsel %vm387, %v392, %v391
        %vm394 = vcmp.lt.s32.totalorder %v366, 0
        %v395 = vsub.s32 0, %v366
        %v396 = vsel %vm394, %v395, %v366
        %v397 = vshrl.u32 %v396, 4
        %v398 = vand.u32 %v396, 15
        %v399 = vsub.s32 0, %v398
        %v400 = vsel %vm394, %v399, %v398
        %vm401 = vcmp.lt.s32.totalorder %v367, 0
        %v402 = vsub.s32 0, %v367
        %v403 = vsel %vm401, %v402, %v367
        %v404 = vshrl.u32 %v403, 4
        %v405 = vand.u32 %v403, 15
        %v406 = vsub.s32 0, %v405
        %v407 = vsel %vm401, %v406, %v405
        %vm408 = vcmp.lt.s32.totalorder %v368, 0
        %v409 = vsub.s32 0, %v368
        %v410 = vsel %vm408, %v409, %v368
        %v411 = vshrl.u32 %v410, 4
        %v412 = vand.u32 %v410, 15
        %v413 = vsub.s32 0, %v412
        %v414 = vsel %vm408, %v413, %v412
        %vm415 = vcmp.lt.s32.totalorder %v369, 0
        %v416 = vsub.s32 0, %v369
        %v417 = vsel %vm415, %v416, %v369
        %v418 = vshrl.u32 %v417, 4
        %v419 = vand.u32 %v417, 15
        %v420 = vsub.s32 0, %v419
        %v421 = vsel %vm415, %v420, %v419
        %vm422 = vcmp.lt.s32.totalorder %v370, 0
        %v423 = vsub.s32 0, %v370
        %v424 = vsel %vm422, %v423, %v370
        %v425 = vshrl.u32 %v424, 4
        %v426 = vand.u32 %v424, 15
        %v427 = vsub.s32 0, %v426
        %v428 = vsel %vm422, %v427, %v426
        %vm429 = vcmp.lt.s32.totalorder %v371, 0
        %v430 = vsub.s32 0, %v371
        %v431 = vsel %vm429, %v430, %v371
        %v432 = vshrl.u32 %v431, 4
        %v433 = vand.u32 %v431, 15
        %v434 = vsub.s32 0, %v433
        %v435 = vsel %vm429, %v434, %v433
        %vm436 = vcmp.lt.s32.totalorder %v372, 0
        %v437 = vsub.s32 0, %v372
        %v438 = vsel %vm436, %v437, %v372
        %v439 = vshrl.u32 %v438, 4
        %v440 = vand.u32 %v438, 15
        %v441 = vsub.s32 0, %v440
        %v442 = vsel %vm436, %v441, %v440
        %vm443 = vcmp.lt.s32.totalorder %v373, 0
        %v444 = vsub.s32 0, %v373
        %v445 = vsel %vm443, %v444, %v373
        %v446 = vshrl.u32 %v445, 4
        %v447 = vand.u32 %v445, 15
        %v448 = vsub.s32 0, %v447
        %v449 = vsel %vm443, %v448, %v447
        %vm450 = vcmp.lt.s32.totalorder %v374, 0
        %v451 = vsub.s32 0, %v374
        %v452 = vsel %vm450, %v451, %v374
        %v453 = vshrl.u32 %v452, 4
        %v454 = vand.u32 %v452, 15
        %v455 = vsub.s32 0, %v454
        %v456 = vsel %vm450, %v455, %v454
        %vm457 = vcmp.lt.s32.totalorder %v375, 0
        %v458 = vsub.s32 0, %v375
        %v459 = vsel %vm457, %v458, %v375
        %v460 = vshrl.u32 %v459, 4
        %v461 = vand.u32 %v459, 15
        %v462 = vsub.s32 0, %v461
        %v463 = vsel %vm457, %v462, %v461
        %vm464 = vcmp.lt.s32.totalorder %v376, 0
        %v465 = vsub.s32 0, %v376
        %v466 = vsel %vm464, %v465, %v376
        %v467 = vshrl.u32 %v466, 4
        %v468 = vand.u32 %v466, 15
        %v469 = vsub.s32 0, %v468
        %v470 = vsel %vm464, %v469, %v468
        %vm471 = vcmp.lt.s32.totalorder %v377, 0
        %v472 = vsub.s32 0, %v377
        %v473 = vsel %vm471, %v472, %v377
        %v474 = vshrl.u32 %v473, 4
        %v475 = vand.u32 %v473, 15
        %v476 = vsub.s32 0, %v475
        %v477 = vsel %vm471, %v476, %v475
        %vm478 = vcmp.lt.s32.totalorder %v378, 0
        %v479 = vsub.s32 0, %v378
        %v480 = vsel %vm478, %v479, %v378
        %v481 = vshrl.u32 %v480, 4
        %v482 = vand.u32 %v480, 15
        %v483 = vsub.s32 0, %v482
        %v484 = vsel %vm478, %v483, %v482
        %vm485 = vcmp.lt.s32.totalorder %v379, 0
        %v486 = vsub.s32 0, %v379
        %v487 = vsel %vm485, %v486, %v379
        %v488 = vshrl.u32 %v487, 4
        %v489 = vand.u32 %v487, 15
        %v490 = vsub.s32 0, %v489
        %v491 = vsel %vm485, %v490, %v489
        %vm492 = vcmp.ne.s32.totalorder %v386, 0
        %vm493 = vcmp.ne.s32.totalorder %v393, 0
        %vm494 = vcmp.ne.s32.totalorder %v400, 0
        %vm495 = vcmp.ne.s32.totalorder %v407, 0
        %vm496 = vcmp.ne.s32.totalorder %v414, 0
        %vm497 = vcmp.ne.s32.totalorder %v421, 0
        %vm498 = vcmp.ne.s32.totalorder %v428, 0
        %vm499 = vcmp.ne.s32.totalorder %v435, 0
        %vm500 = vcmp.ne.s32.totalorder %v442, 0
        %vm501 = vcmp.ne.s32.totalorder %v449, 0
        %vm502 = vcmp.ne.s32.totalorder %v456, 0
        %vm503 = vcmp.ne.s32.totalorder %v463, 0
        %vm504 = vcmp.ne.s32.totalorder %v470, 0
        %vm505 = vcmp.ne.s32.totalorder %v477, 0
        %vm506 = vcmp.ne.s32.totalorder %v484, 0
        %vm507 = vcmp.ne.s32.totalorder %v491, 0
        %vm508 = vcmp.lt.s32.totalorder %v386, 0
        %vm509 = vcmp.lt.s32.totalorder %v393, 0
        %vm510 = vcmp.lt.s32.totalorder %v400, 0
        %vm511 = vcmp.lt.s32.totalorder %v407, 0
        %vm512 = vcmp.lt.s32.totalorder %v414, 0
        %vm513 = vcmp.lt.s32.totalorder %v421, 0
        %vm514 = vcmp.lt.s32.totalorder %v428, 0
        %vm515 = vcmp.lt.s32.totalorder %v435, 0
        %vm516 = vcmp.lt.s32.totalorder %v442, 0
        %vm517 = vcmp.lt.s32.totalorder %v449, 0
        %vm518 = vcmp.lt.s32.totalorder %v456, 0
        %vm519 = vcmp.lt.s32.totalorder %v463, 0
        %vm520 = vcmp.lt.s32.totalorder %v470, 0
        %vm521 = vcmp.lt.s32.totalorder %v477, 0
        %vm522 = vcmp.lt.s32.totalorder %v484, 0
        %vm523 = vcmp.lt.s32.totalorder %v491, 0
        %vm524 = vmand %vm508, %vm492
        %vm525 = vmand %vm509, %vm493
        %vm526 = vmand %vm510, %vm494
        %vm527 = vmand %vm511, %vm495
        %vm528 = vmand %vm512, %vm496
        %vm529 = vmand %vm513, %vm497
        %vm530 = vmand %vm514, %vm498
        %vm531 = vmand %vm515, %vm499
        %vm532 = vmand %vm516, %vm500
        %vm533 = vmand %vm517, %vm501
        %vm534 = vmand %vm518, %vm502
        %vm535 = vmand %vm519, %vm503
        %vm536 = vmand %vm520, %vm504
        %vm537 = vmand %vm521, %vm505
        %vm538 = vmand %vm522, %vm506
        %vm539 = vmand %vm523, %vm507
        %v540 = vadd.s32 %v386, 16
        %v541 = vadd.s32 %v393, 16
        %v542 = vadd.s32 %v400, 16
        %v543 = vadd.s32 %v407, 16
        %v544 = vadd.s32 %v414, 16
        %v545 = vadd.s32 %v421, 16
        %v546 = vadd.s32 %v428, 16
        %v547 = vadd.s32 %v435, 16
        %v548 = vadd.s32 %v442, 16
        %v549 = vadd.s32 %v449, 16
        %v550 = vadd.s32 %v456, 16
        %v551 = vadd.s32 %v463, 16
        %v552 = vadd.s32 %v470, 16
        %v553 = vadd.s32 %v477, 16
        %v554 = vadd.s32 %v484, 16
        %v555 = vadd.s32 %v491, 16
        %v556 = vsel %vm524, %v540, %v386
        %v557 = vsel %vm525, %v541, %v393
        %v558 = vsel %vm526, %v542, %v400
        %v559 = vsel %vm527, %v543, %v407
        %v560 = vsel %vm528, %v544, %v414
        %v561 = vsel %vm529, %v545, %v421
        %v562 = vsel %vm530, %v546, %v428
        %v563 = vsel %vm531, %v547, %v435
        %v564 = vsel %vm532, %v548, %v442
        %v565 = vsel %vm533, %v549, %v449
        %v566 = vsel %vm534, %v550, %v456
        %v567 = vsel %vm535, %v551, %v463
        %v568 = vsel %vm536, %v552, %v470
        %v569 = vsel %vm537, %v553, %v477
        %v570 = vsel %vm538, %v554, %v484
        %v571 = vsel %vm539, %v555, %v491
        %vm572 = vcmp.ge.s32.totalorder %v556, 1
        %vm573 = vcmp.ge.s32.totalorder %v557, 1
        %vm574 = vcmp.ge.s32.totalorder %v558, 1
        %vm575 = vcmp.ge.s32.totalorder %v559, 1
        %vm576 = vcmp.ge.s32.totalorder %v560, 1
        %vm577 = vcmp.ge.s32.totalorder %v561, 1
        %vm578 = vcmp.ge.s32.totalorder %v562, 1
        %vm579 = vcmp.ge.s32.totalorder %v563, 1
        %vm580 = vcmp.ge.s32.totalorder %v564, 1
        %vm581 = vcmp.ge.s32.totalorder %v565, 1
        %vm582 = vcmp.ge.s32.totalorder %v566, 1
        %vm583 = vcmp.ge.s32.totalorder %v567, 1
        %vm584 = vcmp.ge.s32.totalorder %v568, 1
        %vm585 = vcmp.ge.s32.totalorder %v569, 1
        %vm586 = vcmp.ge.s32.totalorder %v570, 1
        %vm587 = vcmp.ge.s32.totalorder %v571, 1
        %vm588 = vcmp.le.s32.totalorder %v556, 14
        %vm589 = vcmp.le.s32.totalorder %v557, 14
        %vm590 = vcmp.le.s32.totalorder %v558, 14
        %vm591 = vcmp.le.s32.totalorder %v559, 14
        %vm592 = vcmp.le.s32.totalorder %v560, 14
        %vm593 = vcmp.le.s32.totalorder %v561, 14
        %vm594 = vcmp.le.s32.totalorder %v562, 14
        %vm595 = vcmp.le.s32.totalorder %v563, 14
        %vm596 = vcmp.le.s32.totalorder %v564, 14
        %vm597 = vcmp.le.s32.totalorder %v565, 14
        %vm598 = vcmp.le.s32.totalorder %v566, 14
        %vm599 = vcmp.le.s32.totalorder %v567, 14
        %vm600 = vcmp.le.s32.totalorder %v568, 14
        %vm601 = vcmp.le.s32.totalorder %v569, 14
        %vm602 = vcmp.le.s32.totalorder %v570, 14
        %vm603 = vcmp.le.s32.totalorder %v571, 14
        %s604 = sadd.s32 %s362, 7
        %s605 = scalar_lea.vmem [#allocation2], %s604
        %v606 = vld [vmem:[%s605] sm:$0xff]
        %v607 = vld [vmem:[%s605 + $0x8] sm:$0xff]
        %v608 = vld [vmem:[%s605 + $0x10] sm:$0xff]
        %v609 = vld [vmem:[%s605 + $0x18] sm:$0xff]
        %v610 = vld [vmem:[%s605 + $0x20] sm:$0xff]
        %v611 = vld [vmem:[%s605 + $0x28] sm:$0xff]
        %v612 = vld [vmem:[%s605 + $0x30] sm:$0xff]
        %v613 = vld [vmem:[%s605 + $0x38] sm:$0xff]
        %v614 = vld [vmem:[%s605 + $0x40] sm:$0xff]
        %v615 = vld [vmem:[%s605 + $0x48] sm:$0xff]
        %v616 = vld [vmem:[%s605 + $0x50] sm:$0xff]
        %v617 = vld [vmem:[%s605 + $0x58] sm:$0xff]
        %v618 = vld [vmem:[%s605 + $0x60] sm:$0xff]
        %v619 = vld [vmem:[%s605 + $0x68] sm:$0xff]
        %v620 = vld [vmem:[%s605 + $0x70] sm:$0xff]
        %v621 = vld [vmem:[%s605 + $0x78] sm:$0xff]
        %v622 = vsel %vm572, %v606, 0.0
        %v623 = vsel %vm573, %v607, 0.0
        %v624 = vsel %vm574, %v608, 0.0
        %v625 = vsel %vm575, %v609, 0.0
        %v626 = vsel %vm576, %v610, 0.0
        %v627 = vsel %vm577, %v611, 0.0
        %v628 = vsel %vm578, %v612, 0.0
        %v629 = vsel %vm579, %v613, 0.0
        %v630 = vsel %vm580, %v614, 0.0
        %v631 = vsel %vm581, %v615, 0.0
        %v632 = vsel %vm582, %v616, 0.0
        %v633 = vsel %vm583, %v617, 0.0
        %v634 = vsel %vm584, %v618, 0.0
        %v635 = vsel %vm585, %v619, 0.0
        %v636 = vsel %vm586, %v620, 0.0
        %v637 = vsel %vm587, %v621, 0.0
        %vm638 = vcmask 64512
        %639 = vst.msk [vmem:[#allocation3] sm:$0xff] %vm638, %v622
        %640 = vst.msk [vmem:[#allocation3 + $0x8] sm:$0xff] %vm638, %v623
        %641 = vst.msk [vmem:[#allocation3 + $0x10] sm:$0xff] %vm638, %v624
        %642 = vst.msk [vmem:[#allocation3 + $0x18] sm:$0xff] %vm638, %v625
        %643 = vst.msk [vmem:[#allocation3 + $0x20] sm:$0xff] %vm638, %v626
        %644 = vst.msk [vmem:[#allocation3 + $0x28] sm:$0xff] %vm638, %v627
        %645 = vst.msk [vmem:[#allocation3 + $0x30] sm:$0xff] %vm638, %v628
        %646 = vst.msk [vmem:[#allocation3 + $0x38] sm:$0xff] %vm638, %v629
        %647 = vst.msk [vmem:[#allocation3 + $0x40] sm:$0xff] %vm638, %v630
        %648 = vst.msk [vmem:[#allocation3 + $0x48] sm:$0xff] %vm638, %v631
        %649 = vst.msk [vmem:[#allocation3 + $0x50] sm:$0xff] %vm638, %v632
        %650 = vst.msk [vmem:[#allocation3 + $0x58] sm:$0xff] %vm638, %v633
        %651 = vst.msk [vmem:[#allocation3 + $0x60] sm:$0xff] %vm638, %v634
        %652 = vst.msk [vmem:[#allocation3 + $0x68] sm:$0xff] %vm638, %v635
        %653 = vst.msk [vmem:[#allocation3 + $0x70] sm:$0xff] %vm638, %v636
        %654 = vst.msk [vmem:[#allocation3 + $0x78] sm:$0xff] %vm638, %v637
        %s655 = sadd.s32 %s362, 8
        %s656 = scalar_lea.vmem [#allocation2], %s655
        %v657 = vld [vmem:[%s656] sm:$0xff]
        %v658 = vld [vmem:[%s656 + $0x8] sm:$0xff]
        %v659 = vld [vmem:[%s656 + $0x10] sm:$0xff]
        %v660 = vld [vmem:[%s656 + $0x18] sm:$0xff]
        %v661 = vld [vmem:[%s656 + $0x20] sm:$0xff]
        %v662 = vld [vmem:[%s656 + $0x28] sm:$0xff]
        %v663 = vld [vmem:[%s656 + $0x30] sm:$0xff]
        %v664 = vld [vmem:[%s656 + $0x38] sm:$0xff]
        %v665 = vld [vmem:[%s656 + $0x40] sm:$0xff]
        %v666 = vld [vmem:[%s656 + $0x48] sm:$0xff]
        %v667 = vld [vmem:[%s656 + $0x50] sm:$0xff]
        %v668 = vld [vmem:[%s656 + $0x58] sm:$0xff]
        %v669 = vld [vmem:[%s656 + $0x60] sm:$0xff]
        %v670 = vld [vmem:[%s656 + $0x68] sm:$0xff]
        %v671 = vld [vmem:[%s656 + $0x70] sm:$0xff]
        %v672 = vld [vmem:[%s656 + $0x78] sm:$0xff]
        %689 = vrot.lane.b32.xlu0 %v657, 8
        %v690 = vpop.permute.xlu0 %689
        %691 = vrot.lane.b32.xlu0 %v658, 8
        %v692 = vpop.permute.xlu0 %691
        %693 = vrot.lane.b32.xlu0 %v659, 8
        %v694 = vpop.permute.xlu0 %693
        %695 = vrot.lane.b32.xlu0 %v660, 8
        %v696 = vpop.permute.xlu0 %695
        %697 = vrot.lane.b32.xlu0 %v661, 8
        %v698 = vpop.permute.xlu0 %697
        %699 = vrot.lane.b32.xlu0 %v662, 8
        %v700 = vpop.permute.xlu0 %699
        %701 = vrot.lane.b32.xlu0 %v663, 8
        %v702 = vpop.permute.xlu0 %701
        %703 = vrot.lane.b32.xlu0 %v664, 8
        %v704 = vpop.permute.xlu0 %703
        %705 = vrot.lane.b32.xlu0 %v665, 8
        %v706 = vpop.permute.xlu0 %705
        %707 = vrot.lane.b32.xlu0 %v666, 8
        %v708 = vpop.permute.xlu0 %707
        %709 = vrot.lane.b32.xlu0 %v667, 8
        %v710 = vpop.permute.xlu0 %709
        %711 = vrot.lane.b32.xlu0 %v668, 8
        %v712 = vpop.permute.xlu0 %711
        %713 = vrot.lane.b32.xlu0 %v669, 8
        %v714 = vpop.permute.xlu0 %713
        %715 = vrot.lane.b32.xlu0 %v670, 8
        %v716 = vpop.permute.xlu0 %715
        %717 = vrot.lane.b32.xlu0 %v671, 8
        %v718 = vpop.permute.xlu0 %717
        %719 = vrot.lane.b32.xlu0 %v672, 8
        %v720 = vpop.permute.xlu0 %719
        %vm737 = vcmask 130112
        %738 = vst.msk [vmem:[#allocation3] sm:$0xff] %vm737, %v690
        %739 = vst.msk [vmem:[#allocation3 + $0x8] sm:$0xff] %vm737, %v692
        %740 = vst.msk [vmem:[#allocation3 + $0x10] sm:$0xff] %vm737, %v694
        %741 = vst.msk [vmem:[#allocation3 + $0x18] sm:$0xff] %vm737, %v696
        %742 = vst.msk [vmem:[#allocation3 + $0x20] sm:$0xff] %vm737, %v698
        %743 = vst.msk [vmem:[#allocation3 + $0x28] sm:$0xff] %vm737, %v700
        %744 = vst.msk [vmem:[#allocation3 + $0x30] sm:$0xff] %vm737, %v702
        %745 = vst.msk [vmem:[#allocation3 + $0x38] sm:$0xff] %vm737, %v704
        %746 = vst.msk [vmem:[#allocation3 + $0x40] sm:$0xff] %vm737, %v706
        %747 = vst.msk [vmem:[#allocation3 + $0x48] sm:$0xff] %vm737, %v708
        %748 = vst.msk [vmem:[#allocation3 + $0x50] sm:$0xff] %vm737, %v710
        %749 = vst.msk [vmem:[#allocation3 + $0x58] sm:$0xff] %vm737, %v712
        %750 = vst.msk [vmem:[#allocation3 + $0x60] sm:$0xff] %vm737, %v714
        %751 = vst.msk [vmem:[#allocation3 + $0x68] sm:$0xff] %vm737, %v716
        %752 = vst.msk [vmem:[#allocation3 + $0x70] sm:$0xff] %vm737, %v718
        %753 = vst.msk [vmem:[#allocation3 + $0x78] sm:$0xff] %vm737, %v720
        %s754 = sadd.s32 %s362, 9
        %s755 = scalar_lea.vmem [#allocation2], %s754
        %v756 = vld [vmem:[%s755] sm:$0xff]
        %v757 = vld [vmem:[%s755 + $0x8] sm:$0xff]
        %v758 = vld [vmem:[%s755 + $0x10] sm:$0xff]
        %v759 = vld [vmem:[%s755 + $0x18] sm:$0xff]
        %v760 = vld [vmem:[%s755 + $0x20] sm:$0xff]
        %v761 = vld [vmem:[%s755 + $0x28] sm:$0xff]
        %v762 = vld [vmem:[%s755 + $0x30] sm:$0xff]
        %v763 = vld [vmem:[%s755 + $0x38] sm:$0xff]
        %v764 = vld [vmem:[%s755 + $0x40] sm:$0xff]
        %v765 = vld [vmem:[%s755 + $0x48] sm:$0xff]
        %v766 = vld [vmem:[%s755 + $0x50] sm:$0xff]
        %v767 = vld [vmem:[%s755 + $0x58] sm:$0xff]
        %v768 = vld [vmem:[%s755 + $0x60] sm:$0xff]
        %v769 = vld [vmem:[%s755 + $0x68] sm:$0xff]
        %v770 = vld [vmem:[%s755 + $0x70] sm:$0xff]
        %v771 = vld [vmem:[%s755 + $0x78] sm:$0xff]
        %v772 = vsel %vm588, %v756, 0.0
        %v773 = vsel %vm589, %v757, 0.0
        %v774 = vsel %vm590, %v758, 0.0
        %v775 = vsel %vm591, %v759, 0.0
        %v776 = vsel %vm592, %v760, 0.0
        %v777 = vsel %vm593, %v761, 0.0
        %v778 = vsel %vm594, %v762, 0.0
        %v779 = vsel %vm595, %v763, 0.0
        %v780 = vsel %vm596, %v764, 0.0
        %v781 = vsel %vm597, %v765, 0.0
        %v782 = vsel %vm598, %v766, 0.0
        %v783 = vsel %vm599, %v767, 0.0
        %v784 = vsel %vm600, %v768, 0.0
        %v785 = vsel %vm601, %v769, 0.0
        %v786 = vsel %vm602, %v770, 0.0
        %v787 = vsel %vm603, %v771, 0.0
        %804 = vrot.lane.b32.xlu0 %v772, 16
        %v805 = vpop.permute.xlu0 %804
        %806 = vrot.lane.b32.xlu0 %v773, 16
        %v807 = vpop.permute.xlu0 %806
        %808 = vrot.lane.b32.xlu0 %v774, 16
        %v809 = vpop.permute.xlu0 %808
        %810 = vrot.lane.b32.xlu0 %v775, 16
        %v811 = vpop.permute.xlu0 %810
        %812 = vrot.lane.b32.xlu0 %v776, 16
        %v813 = vpop.permute.xlu0 %812
        %814 = vrot.lane.b32.xlu0 %v777, 16
        %v815 = vpop.permute.xlu0 %814
        %816 = vrot.lane.b32.xlu0 %v778, 16
        %v817 = vpop.permute.xlu0 %816
        %818 = vrot.lane.b32.xlu0 %v779, 16
        %v819 = vpop.permute.xlu0 %818
        %820 = vrot.lane.b32.xlu0 %v780, 16
        %v821 = vpop.permute.xlu0 %820
        %822 = vrot.lane.b32.xlu0 %v781, 16
        %v823 = vpop.permute.xlu0 %822
        %824 = vrot.lane.b32.xlu0 %v782, 16
        %v825 = vpop.permute.xlu0 %824
        %826 = vrot.lane.b32.xlu0 %v783, 16
        %v827 = vpop.permute.xlu0 %826
        %828 = vrot.lane.b32.xlu0 %v784, 16
        %v829 = vpop.permute.xlu0 %828
        %830 = vrot.lane.b32.xlu0 %v785, 16
        %v831 = vpop.permute.xlu0 %830
        %832 = vrot.lane.b32.xlu0 %v786, 16
        %v833 = vpop.permute.xlu0 %832
        %834 = vrot.lane.b32.xlu0 %v787, 16
        %v835 = vpop.permute.xlu0 %834
        %vm852 = vcmask 195712
        %853 = vst.msk [vmem:[#allocation3] sm:$0xff] %vm852, %v805
        %854 = vst.msk [vmem:[#allocation3 + $0x8] sm:$0xff] %vm852, %v807
        %855 = vst.msk [vmem:[#allocation3 + $0x10] sm:$0xff] %vm852, %v809
        %856 = vst.msk [vmem:[#allocation3 + $0x18] sm:$0xff] %vm852, %v811
        %857 = vst.msk [vmem:[#allocation3 + $0x20] sm:$0xff] %vm852, %v813
        %858 = vst.msk [vmem:[#allocation3 + $0x28] sm:$0xff] %vm852, %v815
        %859 = vst.msk [vmem:[#allocation3 + $0x30] sm:$0xff] %vm852, %v817
        %860 = vst.msk [vmem:[#allocation3 + $0x38] sm:$0xff] %vm852, %v819
        %861 = vst.msk [vmem:[#allocation3 + $0x40] sm:$0xff] %vm852, %v821
        %862 = vst.msk [vmem:[#allocation3 + $0x48] sm:$0xff] %vm852, %v823
        %863 = vst.msk [vmem:[#allocation3 + $0x50] sm:$0xff] %vm852, %v825
        %864 = vst.msk [vmem:[#allocation3 + $0x58] sm:$0xff] %vm852, %v827
        %865 = vst.msk [vmem:[#allocation3 + $0x60] sm:$0xff] %vm852, %v829
        %866 = vst.msk [vmem:[#allocation3 + $0x68] sm:$0xff] %vm852, %v831
        %867 = vst.msk [vmem:[#allocation3 + $0x70] sm:$0xff] %vm852, %v833
        %868 = vst.msk [vmem:[#allocation3 + $0x78] sm:$0xff] %vm852, %v835
        %s869 = sadd.s32 %s362, 23
        %s870 = scalar_lea.vmem [#allocation2], %s869
        %v871 = vld [vmem:[%s870] sm:$0xff]
        %v872 = vld [vmem:[%s870 + $0x8] sm:$0xff]
        %v873 = vld [vmem:[%s870 + $0x10] sm:$0xff]
        %v874 = vld [vmem:[%s870 + $0x18] sm:$0xff]
        %v875 = vld [vmem:[%s870 + $0x20] sm:$0xff]
        %v876 = vld [vmem:[%s870 + $0x28] sm:$0xff]
        %v877 = vld [vmem:[%s870 + $0x30] sm:$0xff]
        %v878 = vld [vmem:[%s870 + $0x38] sm:$0xff]
        %v879 = vld [vmem:[%s870 + $0x40] sm:$0xff]
        %v880 = vld [vmem:[%s870 + $0x48] sm:$0xff]
        %v881 = vld [vmem:[%s870 + $0x50] sm:$0xff]
        %v882 = vld [vmem:[%s870 + $0x58] sm:$0xff]
        %v883 = vld [vmem:[%s870 + $0x60] sm:$0xff]
        %v884 = vld [vmem:[%s870 + $0x68] sm:$0xff]
        %v885 = vld [vmem:[%s870 + $0x70] sm:$0xff]
        %v886 = vld [vmem:[%s870 + $0x78] sm:$0xff]
        %v887 = vsel %vm572, %v871, 0.0
        %v888 = vsel %vm573, %v872, 0.0
        %v889 = vsel %vm574, %v873, 0.0
        %v890 = vsel %vm575, %v874, 0.0
        %v891 = vsel %vm576, %v875, 0.0
        %v892 = vsel %vm577, %v876, 0.0
        %v893 = vsel %vm578, %v877, 0.0
        %v894 = vsel %vm579, %v878, 0.0
        %v895 = vsel %vm580, %v879, 0.0
        %v896 = vsel %vm581, %v880, 0.0
        %v897 = vsel %vm582, %v881, 0.0
        %v898 = vsel %vm583, %v882, 0.0
        %v899 = vsel %vm584, %v883, 0.0
        %v900 = vsel %vm585, %v884, 0.0
        %v901 = vsel %vm586, %v885, 0.0
        %v902 = vsel %vm587, %v886, 0.0
        %919 = vrot.lane.b32.xlu0 %v887, 24
        %v920 = vpop.permute.xlu0 %919
        %921 = vrot.lane.b32.xlu0 %v888, 24
        %v922 = vpop.permute.xlu0 %921
        %923 = vrot.lane.b32.xlu0 %v889, 24
        %v924 = vpop.permute.xlu0 %923
        %925 = vrot.lane.b32.xlu0 %v890, 24
        %v926 = vpop.permute.xlu0 %925
        %927 = vrot.lane.b32.xlu0 %v891, 24
        %v928 = vpop.permute.xlu0 %927
        %929 = vrot.lane.b32.xlu0 %v892, 24
        %v930 = vpop.permute.xlu0 %929
        %931 = vrot.lane.b32.xlu0 %v893, 24
        %v932 = vpop.permute.xlu0 %931
        %933 = vrot.lane.b32.xlu0 %v894, 24
        %v934 = vpop.permute.xlu0 %933
        %935 = vrot.lane.b32.xlu0 %v895, 24
        %v936 = vpop.permute.xlu0 %935
        %937 = vrot.lane.b32.xlu0 %v896, 24
        %v938 = vpop.permute.xlu0 %937
        %939 = vrot.lane.b32.xlu0 %v897, 24
        %v940 = vpop.permute.xlu0 %939
        %941 = vrot.lane.b32.xlu0 %v898, 24
        %v942 = vpop.permute.xlu0 %941
        %943 = vrot.lane.b32.xlu0 %v899, 24
        %v944 = vpop.permute.xlu0 %943
        %945 = vrot.lane.b32.xlu0 %v900, 24
        %v946 = vpop.permute.xlu0 %945
        %947 = vrot.lane.b32.xlu0 %v901, 24
        %v948 = vpop.permute.xlu0 %947
        %949 = vrot.lane.b32.xlu0 %v902, 24
        %v950 = vpop.permute.xlu0 %949
        %vm967 = vcmask 261312
        %968 = vst.msk [vmem:[#allocation3] sm:$0xff] %vm967, %v920
        %969 = vst.msk [vmem:[#allocation3 + $0x8] sm:$0xff] %vm967, %v922
        %970 = vst.msk [vmem:[#allocation3 + $0x10] sm:$0xff] %vm967, %v924
        %971 = vst.msk [vmem:[#allocation3 + $0x18] sm:$0xff] %vm967, %v926
        %972 = vst.msk [vmem:[#allocation3 + $0x20] sm:$0xff] %vm967, %v928
        %973 = vst.msk [vmem:[#allocation3 + $0x28] sm:$0xff] %vm967, %v930
        %974 = vst.msk [vmem:[#allocation3 + $0x30] sm:$0xff] %vm967, %v932
        %975 = vst.msk [vmem:[#allocation3 + $0x38] sm:$0xff] %vm967, %v934
        %976 = vst.msk [vmem:[#allocation3 + $0x40] sm:$0xff] %vm967, %v936
        %977 = vst.msk [vmem:[#allocation3 + $0x48] sm:$0xff] %vm967, %v938
        %978 = vst.msk [vmem:[#allocation3 + $0x50] sm:$0xff] %vm967, %v940
        %979 = vst.msk [vmem:[#allocation3 + $0x58] sm:$0xff] %vm967, %v942
        %980 = vst.msk [vmem:[#allocation3 + $0x60] sm:$0xff] %vm967, %v944
        %981 = vst.msk [vmem:[#allocation3 + $0x68] sm:$0xff] %vm967, %v946
        %982 = vst.msk [vmem:[#allocation3 + $0x70] sm:$0xff] %vm967, %v948
        %983 = vst.msk [vmem:[#allocation3 + $0x78] sm:$0xff] %vm967, %v950
        %s984 = sadd.s32 %s362, 24
        %s985 = scalar_lea.vmem [#allocation2], %s984
        %v986 = vld [vmem:[%s985] sm:$0xff]
        %v987 = vld [vmem:[%s985 + $0x8] sm:$0xff]
        %v988 = vld [vmem:[%s985 + $0x10] sm:$0xff]
        %v989 = vld [vmem:[%s985 + $0x18] sm:$0xff]
        %v990 = vld [vmem:[%s985 + $0x20] sm:$0xff]
        %v991 = vld [vmem:[%s985 + $0x28] sm:$0xff]
        %v992 = vld [vmem:[%s985 + $0x30] sm:$0xff]
        %v993 = vld [vmem:[%s985 + $0x38] sm:$0xff]
        %v994 = vld [vmem:[%s985 + $0x40] sm:$0xff]
        %v995 = vld [vmem:[%s985 + $0x48] sm:$0xff]
        %v996 = vld [vmem:[%s985 + $0x50] sm:$0xff]
        %v997 = vld [vmem:[%s985 + $0x58] sm:$0xff]
        %v998 = vld [vmem:[%s985 + $0x60] sm:$0xff]
        %v999 = vld [vmem:[%s985 + $0x68] sm:$0xff]
        %v1000 = vld [vmem:[%s985 + $0x70] sm:$0xff]
        %v1001 = vld [vmem:[%s985 + $0x78] sm:$0xff]
        %1018 = vrot.lane.b32.xlu0 %v986, 32
        %v1019 = vpop.permute.xlu0 %1018
        %1020 = vrot.lane.b32.xlu0 %v987, 32
        %v1021 = vpop.permute.xlu0 %1020
        %1022 = vrot.lane.b32.xlu0 %v988, 32
        %v1023 = vpop.permute.xlu0 %1022
        %1024 = vrot.lane.b32.xlu0 %v989, 32
        %v1025 = vpop.permute.xlu0 %1024
        %1026 = vrot.lane.b32.xlu0 %v990, 32
        %v1027 = vpop.permute.xlu0 %1026
        %1028 = vrot.lane.b32.xlu0 %v991, 32
        %v1029 = vpop.permute.xlu0 %1028
        %1030 = vrot.lane.b32.xlu0 %v992, 32
        %v1031 = vpop.permute.xlu0 %1030
        %1032 = vrot.lane.b32.xlu0 %v993, 32
        %v1033 = vpop.permute.xlu0 %1032
        %1034 = vrot.lane.b32.xlu0 %v994, 32
        %v1035 = vpop.permute.xlu0 %1034
        %1036 = vrot.lane.b32.xlu0 %v995, 32
        %v1037 = vpop.permute.xlu0 %1036
        %1038 = vrot.lane.b32.xlu0 %v996, 32
        %v1039 = vpop.permute.xlu0 %1038
        %1040 = vrot.lane.b32.xlu0 %v997, 32
        %v1041 = vpop.permute.xlu0 %1040
        %1042 = vrot.lane.b32.xlu0 %v998, 32
        %v1043 = vpop.permute.xlu0 %1042
        %1044 = vrot.lane.b32.xlu0 %v999, 32
        %v1045 = vpop.permute.xlu0 %1044
        %1046 = vrot.lane.b32.xlu0 %v1000, 32
        %v1047 = vpop.permute.xlu0 %1046
        %1048 = vrot.lane.b32.xlu0 %v1001, 32
        %v1049 = vpop.permute.xlu0 %1048
        %vm1066 = vcmask 326912
        %1067 = vst.msk [vmem:[#allocation3] sm:$0xff] %vm1066, %v1019
        %1068 = vst.msk [vmem:[#allocation3 + $0x8] sm:$0xff] %vm1066, %v1021
        %1069 = vst.msk [vmem:[#allocation3 + $0x10] sm:$0xff] %vm1066, %v1023
        %1070 = vst.msk [vmem:[#allocation3 + $0x18] sm:$0xff] %vm1066, %v1025
        %1071 = vst.msk [vmem:[#allocation3 + $0x20] sm:$0xff] %vm1066, %v1027
        %1072 = vst.msk [vmem:[#allocation3 + $0x28] sm:$0xff] %vm1066, %v1029
        %1073 = vst.msk [vmem:[#allocation3 + $0x30] sm:$0xff] %vm1066, %v1031
        %1074 = vst.msk [vmem:[#allocation3 + $0x38] sm:$0xff] %vm1066, %v1033
        %1075 = vst.msk [vmem:[#allocation3 + $0x40] sm:$0xff] %vm1066, %v1035
        %1076 = vst.msk [vmem:[#allocation3 + $0x48] sm:$0xff] %vm1066, %v1037
        %1077 = vst.msk [vmem:[#allocation3 + $0x50] sm:$0xff] %vm1066, %v1039
        %1078 = vst.msk [vmem:[#allocation3 + $0x58] sm:$0xff] %vm1066, %v1041
        %1079 = vst.msk [vmem:[#allocation3 + $0x60] sm:$0xff] %vm1066, %v1043
        %1080 = vst.msk [vmem:[#allocation3 + $0x68] sm:$0xff] %vm1066, %v1045
        %1081 = vst.msk [vmem:[#allocation3 + $0x70] sm:$0xff] %vm1066, %v1047
        %1082 = vst.msk [vmem:[#allocation3 + $0x78] sm:$0xff] %vm1066, %v1049
        %s1083 = sadd.s32 %s362, 25
        %s1084 = scalar_lea.vmem [#allocation2], %s1083
        %v1085 = vld [vmem:[%s1084] sm:$0xff]
        %v1086 = vld [vmem:[%s1084 + $0x8] sm:$0xff]
        %v1087 = vld [vmem:[%s1084 + $0x10] sm:$0xff]
        %v1088 = vld [vmem:[%s1084 + $0x18] sm:$0xff]
        %v1089 = vld [vmem:[%s1084 + $0x20] sm:$0xff]
        %v1090 = vld [vmem:[%s1084 + $0x28] sm:$0xff]
        %v1091 = vld [vmem:[%s1084 + $0x30] sm:$0xff]
        %v1092 = vld [vmem:[%s1084 + $0x38] sm:$0xff]
        %v1093 = vld [vmem:[%s1084 + $0x40] sm:$0xff]
        %v1094 = vld [vmem:[%s1084 + $0x48] sm:$0xff]
        %v1095 = vld [vmem:[%s1084 + $0x50] sm:$0xff]
        %v1096 = vld [vmem:[%s1084 + $0x58] sm:$0xff]
        %v1097 = vld [vmem:[%s1084 + $0x60] sm:$0xff]
        %v1098 = vld [vmem:[%s1084 + $0x68] sm:$0xff]
        %v1099 = vld [vmem:[%s1084 + $0x70] sm:$0xff]
        %v1100 = vld [vmem:[%s1084 + $0x78] sm:$0xff]
        %v1101 = vsel %vm588, %v1085, 0.0
        %v1102 = vsel %vm589, %v1086, 0.0
        %v1103 = vsel %vm590, %v1087, 0.0
        %v1104 = vsel %vm591, %v1088, 0.0
        %v1105 = vsel %vm592, %v1089, 0.0
        %v1106 = vsel %vm593, %v1090, 0.0
        %v1107 = vsel %vm594, %v1091, 0.0
        %v1108 = vsel %vm595, %v1092, 0.0
        %v1109 = vsel %vm596, %v1093, 0.0
        %v1110 = vsel %vm597, %v1094, 0.0
        %v1111 = vsel %vm598, %v1095, 0.0
        %v1112 = vsel %vm599, %v1096, 0.0
        %v1113 = vsel %vm600, %v1097, 0.0
        %v1114 = vsel %vm601, %v1098, 0.0
        %v1115 = vsel %vm602, %v1099, 0.0
        %v1116 = vsel %vm603, %v1100, 0.0
        %1133 = vrot.lane.b32.xlu0 %v1101, 40
        %v1134 = vpop.permute.xlu0 %1133
        %1135 = vrot.lane.b32.xlu0 %v1102, 40
        %v1136 = vpop.permute.xlu0 %1135
        %1137 = vrot.lane.b32.xlu0 %v1103, 40
        %v1138 = vpop.permute.xlu0 %1137
        %1139 = vrot.lane.b32.xlu0 %v1104, 40
        %v1140 = vpop.permute.xlu0 %1139
        %1141 = vrot.lane.b32.xlu0 %v1105, 40
        %v1142 = vpop.permute.xlu0 %1141
        %1143 = vrot.lane.b32.xlu0 %v1106, 40
        %v1144 = vpop.permute.xlu0 %1143
        %1145 = vrot.lane.b32.xlu0 %v1107, 40
        %v1146 = vpop.permute.xlu0 %1145
        %1147 = vrot.lane.b32.xlu0 %v1108, 40
        %v1148 = vpop.permute.xlu0 %1147
        %1149 = vrot.lane.b32.xlu0 %v1109, 40
        %v1150 = vpop.permute.xlu0 %1149
        %1151 = vrot.lane.b32.xlu0 %v1110, 40
        %v1152 = vpop.permute.xlu0 %1151
        %1153 = vrot.lane.b32.xlu0 %v1111, 40
        %v1154 = vpop.permute.xlu0 %1153
        %1155 = vrot.lane.b32.xlu0 %v1112, 40
        %v1156 = vpop.permute.xlu0 %1155
        %1157 = vrot.lane.b32.xlu0 %v1113, 40
        %v1158 = vpop.permute.xlu0 %1157
        %1159 = vrot.lane.b32.xlu0 %v1114, 40
        %v1160 = vpop.permute.xlu0 %1159
        %1161 = vrot.lane.b32.xlu0 %v1115, 40
        %v1162 = vpop.permute.xlu0 %1161
        %1163 = vrot.lane.b32.xlu0 %v1116, 40
        %v1164 = vpop.permute.xlu0 %1163
        %vm1181 = vcmask 392512
        %1182 = vst.msk [vmem:[#allocation3] sm:$0xff] %vm1181, %v1134
        %1183 = vst.msk [vmem:[#allocation3 + $0x8] sm:$0xff] %vm1181, %v1136
        %1184 = vst.msk [vmem:[#allocation3 + $0x10] sm:$0xff] %vm1181, %v1138
        %1185 = vst.msk [vmem:[#allocation3 + $0x18] sm:$0xff] %vm1181, %v1140
        %1186 = vst.msk [vmem:[#allocation3 + $0x20] sm:$0xff] %vm1181, %v1142
        %1187 = vst.msk [vmem:[#allocation3 + $0x28] sm:$0xff] %vm1181, %v1144
        %1188 = vst.msk [vmem:[#allocation3 + $0x30] sm:$0xff] %vm1181, %v1146
        %1189 = vst.msk [vmem:[#allocation3 + $0x38] sm:$0xff] %vm1181, %v1148
        %1190 = vst.msk [vmem:[#allocation3 + $0x40] sm:$0xff] %vm1181, %v1150
        %1191 = vst.msk [vmem:[#allocation3 + $0x48] sm:$0xff] %vm1181, %v1152
        %1192 = vst.msk [vmem:[#allocation3 + $0x50] sm:$0xff] %vm1181, %v1154
        %1193 = vst.msk [vmem:[#allocation3 + $0x58] sm:$0xff] %vm1181, %v1156
        %1194 = vst.msk [vmem:[#allocation3 + $0x60] sm:$0xff] %vm1181, %v1158
        %1195 = vst.msk [vmem:[#allocation3 + $0x68] sm:$0xff] %vm1181, %v1160
        %1196 = vst.msk [vmem:[#allocation3 + $0x70] sm:$0xff] %vm1181, %v1162
        %1197 = vst.msk [vmem:[#allocation3 + $0x78] sm:$0xff] %vm1181, %v1164
        %s1198 = sadd.s32 %s362, 39
        %s1199 = scalar_lea.vmem [#allocation2], %s1198
        %v1200 = vld [vmem:[%s1199] sm:$0xff]
        %v1201 = vld [vmem:[%s1199 + $0x8] sm:$0xff]
        %v1202 = vld [vmem:[%s1199 + $0x10] sm:$0xff]
        %v1203 = vld [vmem:[%s1199 + $0x18] sm:$0xff]
        %v1204 = vld [vmem:[%s1199 + $0x20] sm:$0xff]
        %v1205 = vld [vmem:[%s1199 + $0x28] sm:$0xff]
        %v1206 = vld [vmem:[%s1199 + $0x30] sm:$0xff]
        %v1207 = vld [vmem:[%s1199 + $0x38] sm:$0xff]
        %v1208 = vld [vmem:[%s1199 + $0x40] sm:$0xff]
        %v1209 = vld [vmem:[%s1199 + $0x48] sm:$0xff]
        %v1210 = vld [vmem:[%s1199 + $0x50] sm:$0xff]
        %v1211 = vld [vmem:[%s1199 + $0x58] sm:$0xff]
        %v1212 = vld [vmem:[%s1199 + $0x60] sm:$0xff]
        %v1213 = vld [vmem:[%s1199 + $0x68] sm:$0xff]
        %v1214 = vld [vmem:[%s1199 + $0x70] sm:$0xff]
        %v1215 = vld [vmem:[%s1199 + $0x78] sm:$0xff]
        %v1216 = vsel %vm572, %v1200, 0.0
        %v1217 = vsel %vm573, %v1201, 0.0
        %v1218 = vsel %vm574, %v1202, 0.0
        %v1219 = vsel %vm575, %v1203, 0.0
        %v1220 = vsel %vm576, %v1204, 0.0
        %v1221 = vsel %vm577, %v1205, 0.0
        %v1222 = vsel %vm578, %v1206, 0.0
        %v1223 = vsel %vm579, %v1207, 0.0
        %v1224 = vsel %vm580, %v1208, 0.0
        %v1225 = vsel %vm581, %v1209, 0.0
        %v1226 = vsel %vm582, %v1210, 0.0
        %v1227 = vsel %vm583, %v1211, 0.0
        %v1228 = vsel %vm584, %v1212, 0.0
        %v1229 = vsel %vm585, %v1213, 0.0
        %v1230 = vsel %vm586, %v1214, 0.0
        %v1231 = vsel %vm587, %v1215, 0.0
        %1248 = vrot.lane.b32.xlu0 %v1216, 48
        %v1249 = vpop.permute.xlu0 %1248
        %1250 = vrot.lane.b32.xlu0 %v1217, 48
        %v1251 = vpop.permute.xlu0 %1250
        %1252 = vrot.lane.b32.xlu0 %v1218, 48
        %v1253 = vpop.permute.xlu0 %1252
        %1254 = vrot.lane.b32.xlu0 %v1219, 48
        %v1255 = vpop.permute.xlu0 %1254
        %1256 = vrot.lane.b32.xlu0 %v1220, 48
        %v1257 = vpop.permute.xlu0 %1256
        %1258 = vrot.lane.b32.xlu0 %v1221, 48
        %v1259 = vpop.permute.xlu0 %1258
        %1260 = vrot.lane.b32.xlu0 %v1222, 48
        %v1261 = vpop.permute.xlu0 %1260
        %1262 = vrot.lane.b32.xlu0 %v1223, 48
        %v1263 = vpop.permute.xlu0 %1262
        %1264 = vrot.lane.b32.xlu0 %v1224, 48
        %v1265 = vpop.permute.xlu0 %1264
        %1266 = vrot.lane.b32.xlu0 %v1225, 48
        %v1267 = vpop.permute.xlu0 %1266
        %1268 = vrot.lane.b32.xlu0 %v1226, 48
        %v1269 = vpop.permute.xlu0 %1268
        %1270 = vrot.lane.b32.xlu0 %v1227, 48
        %v1271 = vpop.permute.xlu0 %1270
        %1272 = vrot.lane.b32.xlu0 %v1228, 48
        %v1273 = vpop.permute.xlu0 %1272
        %1274 = vrot.lane.b32.xlu0 %v1229, 48
        %v1275 = vpop.permute.xlu0 %1274
        %1276 = vrot.lane.b32.xlu0 %v1230, 48
        %v1277 = vpop.permute.xlu0 %1276
        %1278 = vrot.lane.b32.xlu0 %v1231, 48
        %v1279 = vpop.permute.xlu0 %1278
        %vm1296 = vcmask 458112
        %1297 = vst.msk [vmem:[#allocation3] sm:$0xff] %vm1296, %v1249
        %1298 = vst.msk [vmem:[#allocation3 + $0x8] sm:$0xff] %vm1296, %v1251
        %1299 = vst.msk [vmem:[#allocation3 + $0x10] sm:$0xff] %vm1296, %v1253
        %1300 = vst.msk [vmem:[#allocation3 + $0x18] sm:$0xff] %vm1296, %v1255
        %1301 = vst.msk [vmem:[#allocation3 + $0x20] sm:$0xff] %vm1296, %v1257
        %1302 = vst.msk [vmem:[#allocation3 + $0x28] sm:$0xff] %vm1296, %v1259
        %1303 = vst.msk [vmem:[#allocation3 + $0x30] sm:$0xff] %vm1296, %v1261
        %1304 = vst.msk [vmem:[#allocation3 + $0x38] sm:$0xff] %vm1296, %v1263
        %1305 = vst.msk [vmem:[#allocation3 + $0x40] sm:$0xff] %vm1296, %v1265
        %1306 = vst.msk [vmem:[#allocation3 + $0x48] sm:$0xff] %vm1296, %v1267
        %1307 = vst.msk [vmem:[#allocation3 + $0x50] sm:$0xff] %vm1296, %v1269
        %1308 = vst.msk [vmem:[#allocation3 + $0x58] sm:$0xff] %vm1296, %v1271
        %1309 = vst.msk [vmem:[#allocation3 + $0x60] sm:$0xff] %vm1296, %v1273
        %1310 = vst.msk [vmem:[#allocation3 + $0x68] sm:$0xff] %vm1296, %v1275
        %1311 = vst.msk [vmem:[#allocation3 + $0x70] sm:$0xff] %vm1296, %v1277
        %1312 = vst.msk [vmem:[#allocation3 + $0x78] sm:$0xff] %vm1296, %v1279
        %s1313 = sadd.s32 %s362, 40
        %s1314 = scalar_lea.vmem [#allocation2], %s1313
        %v1315 = vld [vmem:[%s1314] sm:$0xff]
        %v1316 = vld [vmem:[%s1314 + $0x8] sm:$0xff]
        %v1317 = vld [vmem:[%s1314 + $0x10] sm:$0xff]
        %v1318 = vld [vmem:[%s1314 + $0x18] sm:$0xff]
        %v1319 = vld [vmem:[%s1314 + $0x20] sm:$0xff]
        %v1320 = vld [vmem:[%s1314 + $0x28] sm:$0xff]
        %v1321 = vld [vmem:[%s1314 + $0x30] sm:$0xff]
        %v1322 = vld [vmem:[%s1314 + $0x38] sm:$0xff]
        %v1323 = vld [vmem:[%s1314 + $0x40] sm:$0xff]
        %v1324 = vld [vmem:[%s1314 + $0x48] sm:$0xff]
        %v1325 = vld [vmem:[%s1314 + $0x50] sm:$0xff]
        %v1326 = vld [vmem:[%s1314 + $0x58] sm:$0xff]
        %v1327 = vld [vmem:[%s1314 + $0x60] sm:$0xff]
        %v1328 = vld [vmem:[%s1314 + $0x68] sm:$0xff]
        %v1329 = vld [vmem:[%s1314 + $0x70] sm:$0xff]
        %v1330 = vld [vmem:[%s1314 + $0x78] sm:$0xff]
        %1347 = vrot.lane.b32.xlu0 %v1315, 56
        %v1348 = vpop.permute.xlu0 %1347
        %1349 = vrot.lane.b32.xlu0 %v1316, 56
        %v1350 = vpop.permute.xlu0 %1349
        %1351 = vrot.lane.b32.xlu0 %v1317, 56
        %v1352 = vpop.permute.xlu0 %1351
        %1353 = vrot.lane.b32.xlu0 %v1318, 56
        %v1354 = vpop.permute.xlu0 %1353
        %1355 = vrot.lane.b32.xlu0 %v1319, 56
        %v1356 = vpop.permute.xlu0 %1355
        %1357 = vrot.lane.b32.xlu0 %v1320, 56
        %v1358 = vpop.permute.xlu0 %1357
        %1359 = vrot.lane.b32.xlu0 %v1321, 56
        %v1360 = vpop.permute.xlu0 %1359
        %1361 = vrot.lane.b32.xlu0 %v1322, 56
        %v1362 = vpop.permute.xlu0 %1361
        %1363 = vrot.lane.b32.xlu0 %v1323, 56
        %v1364 = vpop.permute.xlu0 %1363
        %1365 = vrot.lane.b32.xlu0 %v1324, 56
        %v1366 = vpop.permute.xlu0 %1365
        %1367 = vrot.lane.b32.xlu0 %v1325, 56
        %v1368 = vpop.permute.xlu0 %1367
        %1369 = vrot.lane.b32.xlu0 %v1326, 56
        %v1370 = vpop.permute.xlu0 %1369
        %1371 = vrot.lane.b32.xlu0 %v1327, 56
        %v1372 = vpop.permute.xlu0 %1371
        %1373 = vrot.lane.b32.xlu0 %v1328, 56
        %v1374 = vpop.permute.xlu0 %1373
        %1375 = vrot.lane.b32.xlu0 %v1329, 56
        %v1376 = vpop.permute.xlu0 %1375
        %1377 = vrot.lane.b32.xlu0 %v1330, 56
        %v1378 = vpop.permute.xlu0 %1377
        %vm1395 = vcmask 523712
        %1396 = vst.msk [vmem:[#allocation3] sm:$0xff] %vm1395, %v1348
        %1397 = vst.msk [vmem:[#allocation3 + $0x8] sm:$0xff] %vm1395, %v1350
        %1398 = vst.msk [vmem:[#allocation3 + $0x10] sm:$0xff] %vm1395, %v1352
        %1399 = vst.msk [vmem:[#allocation3 + $0x18] sm:$0xff] %vm1395, %v1354
        %1400 = vst.msk [vmem:[#allocation3 + $0x20] sm:$0xff] %vm1395, %v1356
        %1401 = vst.msk [vmem:[#allocation3 + $0x28] sm:$0xff] %vm1395, %v1358
        %1402 = vst.msk [vmem:[#allocation3 + $0x30] sm:$0xff] %vm1395, %v1360
        %1403 = vst.msk [vmem:[#allocation3 + $0x38] sm:$0xff] %vm1395, %v1362
        %1404 = vst.msk [vmem:[#allocation3 + $0x40] sm:$0xff] %vm1395, %v1364
        %1405 = vst.msk [vmem:[#allocation3 + $0x48] sm:$0xff] %vm1395, %v1366
        %1406 = vst.msk [vmem:[#allocation3 + $0x50] sm:$0xff] %vm1395, %v1368
        %1407 = vst.msk [vmem:[#allocation3 + $0x58] sm:$0xff] %vm1395, %v1370
        %1408 = vst.msk [vmem:[#allocation3 + $0x60] sm:$0xff] %vm1395, %v1372
        %1409 = vst.msk [vmem:[#allocation3 + $0x68] sm:$0xff] %vm1395, %v1374
        %1410 = vst.msk [vmem:[#allocation3 + $0x70] sm:$0xff] %vm1395, %v1376
        %1411 = vst.msk [vmem:[#allocation3 + $0x78] sm:$0xff] %vm1395, %v1378
        %s1412 = sadd.s32 %s362, 41
        %s1413 = scalar_lea.vmem [#allocation2], %s1412
        %v1414 = vld [vmem:[%s1413] sm:$0xff]
        %v1415 = vld [vmem:[%s1413 + $0x8] sm:$0xff]
        %v1416 = vld [vmem:[%s1413 + $0x10] sm:$0xff]
        %v1417 = vld [vmem:[%s1413 + $0x18] sm:$0xff]
        %v1418 = vld [vmem:[%s1413 + $0x20] sm:$0xff]
        %v1419 = vld [vmem:[%s1413 + $0x28] sm:$0xff]
        %v1420 = vld [vmem:[%s1413 + $0x30] sm:$0xff]
        %v1421 = vld [vmem:[%s1413 + $0x38] sm:$0xff]
        %v1422 = vld [vmem:[%s1413 + $0x40] sm:$0xff]
        %v1423 = vld [vmem:[%s1413 + $0x48] sm:$0xff]
        %v1424 = vld [vmem:[%s1413 + $0x50] sm:$0xff]
        %v1425 = vld [vmem:[%s1413 + $0x58] sm:$0xff]
        %v1426 = vld [vmem:[%s1413 + $0x60] sm:$0xff]
        %v1427 = vld [vmem:[%s1413 + $0x68] sm:$0xff]
        %v1428 = vld [vmem:[%s1413 + $0x70] sm:$0xff]
        %v1429 = vld [vmem:[%s1413 + $0x78] sm:$0xff]
        %v1430 = vsel %vm588, %v1414, 0.0
        %v1431 = vsel %vm589, %v1415, 0.0
        %v1432 = vsel %vm590, %v1416, 0.0
        %v1433 = vsel %vm591, %v1417, 0.0
        %v1434 = vsel %vm592, %v1418, 0.0
        %v1435 = vsel %vm593, %v1419, 0.0
        %v1436 = vsel %vm594, %v1420, 0.0
        %v1437 = vsel %vm595, %v1421, 0.0
        %v1438 = vsel %vm596, %v1422, 0.0
        %v1439 = vsel %vm597, %v1423, 0.0
        %v1440 = vsel %vm598, %v1424, 0.0
        %v1441 = vsel %vm599, %v1425, 0.0
        %v1442 = vsel %vm600, %v1426, 0.0
        %v1443 = vsel %vm601, %v1427, 0.0
        %v1444 = vsel %vm602, %v1428, 0.0
        %v1445 = vsel %vm603, %v1429, 0.0
        %1462 = vrot.lane.b32.xlu0 %v1430, 64
        %v1463 = vpop.permute.xlu0 %1462
        %1464 = vrot.lane.b32.xlu0 %v1431, 64
        %v1465 = vpop.permute.xlu0 %1464
        %1466 = vrot.lane.b32.xlu0 %v1432, 64
        %v1467 = vpop.permute.xlu0 %1466
        %1468 = vrot.lane.b32.xlu0 %v1433, 64
        %v1469 = vpop.permute.xlu0 %1468
        %1470 = vrot.lane.b32.xlu0 %v1434, 64
        %v1471 = vpop.permute.xlu0 %1470
        %1472 = vrot.lane.b32.xlu0 %v1435, 64
        %v1473 = vpop.permute.xlu0 %1472
        %1474 = vrot.lane.b32.xlu0 %v1436, 64
        %v1475 = vpop.permute.xlu0 %1474
        %1476 = vrot.lane.b32.xlu0 %v1437, 64
        %v1477 = vpop.permute.xlu0 %1476
        %1478 = vrot.lane.b32.xlu0 %v1438, 64
        %v1479 = vpop.permute.xlu0 %1478
        %1480 = vrot.lane.b32.xlu0 %v1439, 64
        %v1481 = vpop.permute.xlu0 %1480
        %1482 = vrot.lane.b32.xlu0 %v1440, 64
        %v1483 = vpop.permute.xlu0 %1482
        %1484 = vrot.lane.b32.xlu0 %v1441, 64
        %v1485 = vpop.permute.xlu0 %1484
        %1486 = vrot.lane.b32.xlu0 %v1442, 64
        %v1487 = vpop.permute.xlu0 %1486
        %1488 = vrot.lane.b32.xlu0 %v1443, 64
        %v1489 = vpop.permute.xlu0 %1488
        %1490 = vrot.lane.b32.xlu0 %v1444, 64
        %v1491 = vpop.permute.xlu0 %1490
        %1492 = vrot.lane.b32.xlu0 %v1445, 64
        %v1493 = vpop.permute.xlu0 %1492
        %vm1510 = vcmask 589312
        %1511 = vst.msk [vmem:[#allocation3] sm:$0xff] %vm1510, %v1463
        %1512 = vst.msk [vmem:[#allocation3 + $0x8] sm:$0xff] %vm1510, %v1465
        %1513 = vst.msk [vmem:[#allocation3 + $0x10] sm:$0xff] %vm1510, %v1467
        %1514 = vst.msk [vmem:[#allocation3 + $0x18] sm:$0xff] %vm1510, %v1469
        %1515 = vst.msk [vmem:[#allocation3 + $0x20] sm:$0xff] %vm1510, %v1471
        %1516 = vst.msk [vmem:[#allocation3 + $0x28] sm:$0xff] %vm1510, %v1473
        %1517 = vst.msk [vmem:[#allocation3 + $0x30] sm:$0xff] %vm1510, %v1475
        %1518 = vst.msk [vmem:[#allocation3 + $0x38] sm:$0xff] %vm1510, %v1477
        %1519 = vst.msk [vmem:[#allocation3 + $0x40] sm:$0xff] %vm1510, %v1479
        %1520 = vst.msk [vmem:[#allocation3 + $0x48] sm:$0xff] %vm1510, %v1481
        %1521 = vst.msk [vmem:[#allocation3 + $0x50] sm:$0xff] %vm1510, %v1483
        %1522 = vst.msk [vmem:[#allocation3 + $0x58] sm:$0xff] %vm1510, %v1485
        %1523 = vst.msk [vmem:[#allocation3 + $0x60] sm:$0xff] %vm1510, %v1487
        %1524 = vst.msk [vmem:[#allocation3 + $0x68] sm:$0xff] %vm1510, %v1489
        %1525 = vst.msk [vmem:[#allocation3 + $0x70] sm:$0xff] %vm1510, %v1491
        %1526 = vst.msk [vmem:[#allocation3 + $0x78] sm:$0xff] %vm1510, %v1493
        %v1527 = vld [vmem:[#allocation3] sm:$0xff]
        %v1528 = vld [vmem:[#allocation3 + $0x8] sm:$0xff]
        %v1529 = vld [vmem:[#allocation3 + $0x10] sm:$0xff]
        %v1530 = vld [vmem:[#allocation3 + $0x18] sm:$0xff]
        %v1531 = vld [vmem:[#allocation3 + $0x20] sm:$0xff]
        %v1532 = vld [vmem:[#allocation3 + $0x28] sm:$0xff]
        %v1533 = vld [vmem:[#allocation3 + $0x30] sm:$0xff]
        %v1534 = vld [vmem:[#allocation3 + $0x38] sm:$0xff]
        %v1535 = vld [vmem:[#allocation3 + $0x40] sm:$0xff]
        %v1536 = vld [vmem:[#allocation3 + $0x48] sm:$0xff]
        %v1537 = vld [vmem:[#allocation3 + $0x50] sm:$0xff]
        %v1538 = vld [vmem:[#allocation3 + $0x58] sm:$0xff]
        %v1539 = vld [vmem:[#allocation3 + $0x60] sm:$0xff]
        %v1540 = vld [vmem:[#allocation3 + $0x68] sm:$0xff]
        %v1541 = vld [vmem:[#allocation3 + $0x70] sm:$0xff]
        %v1542 = vld [vmem:[#allocation3 + $0x78] sm:$0xff]
        %v1543 = vld [vmem:[%s1] sm:$0xff]
        %v1544 = vld [vmem:[%s1 + $0x8] sm:$0xff]
        %v1545 = vld [vmem:[%s1 + $0x10] sm:$0xff]
        %v1546 = vld [vmem:[%s1 + $0x18] sm:$0xff]
        %v1547 = vld [vmem:[%s1 + $0x20] sm:$0xff]
        %v1548 = vld [vmem:[%s1 + $0x28] sm:$0xff]
        %v1549 = vld [vmem:[%s1 + $0x30] sm:$0xff]
        %v1550 = vld [vmem:[%s1 + $0x38] sm:$0xff]
        %v1551 = vld [vmem:[%s1 + $0x40] sm:$0xff]
        %v1552 = vld [vmem:[%s1 + $0x48] sm:$0xff]
        %v1553 = vld [vmem:[%s1 + $0x50] sm:$0xff]
        %v1554 = vld [vmem:[%s1 + $0x58] sm:$0xff]
        %v1555 = vld [vmem:[%s1 + $0x60] sm:$0xff]
        %v1556 = vld [vmem:[%s1 + $0x68] sm:$0xff]
        %v1557 = vld [vmem:[%s1 + $0x70] sm:$0xff]
        %v1558 = vld [vmem:[%s1 + $0x78] sm:$0xff]
        %v1559 = vld [vmem:[%s2] sm:$0x1]
        %v1561 = vlaneseq
        %v1562 = vshrl.u32 %v1561, 7
        %v1563 = vsub.s32 0, %v1562
        %v1564 = vrot.slane %v1559, %v1563
        %1566 = vmatprep.subr.mxu0 0.0
        %1567 = vmatpush1.msra.mxu0 %v1558
        %1568 = vmatprep.subr.mxu0 0.0
        %1569 = vmatpush1.msra.mxu0 %v1557
        %1570 = vmatprep.subr.mxu0 0.0
        %1571 = vmatpush1.msra.mxu0 %v1556
        %1572 = vmatprep.subr.mxu0 0.0
        %1573 = vmatpush1.msra.mxu0 %v1555
        %1574 = vmatprep.subr.mxu0 0.0
        %1575 = vmatpush1.msra.mxu0 %v1554
        %1576 = vmatprep.subr.mxu0 0.0
        %1577 = vmatpush1.msra.mxu0 %v1553
        %1578 = vmatprep.subr.mxu0 0.0
        %1579 = vmatpush1.msra.mxu0 %v1552
        %1580 = vmatprep.subr.mxu0 0.0
        %1581 = vmatpush1.msra.mxu0 %v1551
        %1582 = vmatprep.subr.mxu0 0.0
        %1583 = vmatpush1.msra.mxu0 %v1550
        %1584 = vmatprep.subr.mxu0 0.0
        %1585 = vmatpush1.msra.mxu0 %v1549
        %1586 = vmatprep.subr.mxu0 0.0
        %1587 = vmatpush1.msra.mxu0 %v1548
        %1588 = vmatprep.subr.mxu0 0.0
        %1589 = vmatpush1.msra.mxu0 %v1547
        %1590 = vmatprep.subr.mxu0 0.0
        %1591 = vmatpush1.msra.mxu0 %v1546
        %1592 = vmatprep.subr.mxu0 0.0
        %1593 = vmatpush1.msra.mxu0 %v1545
        %1594 = vmatprep.subr.mxu0 0.0
        %1595 = vmatpush1.msra.mxu0 %v1544
        %1596 = vmatprep.subr.mxu0 0.0
        %1597 = vmatpush1.msra.mxu0 %v1543
        %1598 = vmatprep.subr.mxu0 0.0
        %1599 = vmatpush2.msra.mxu0 0.0
        %1600 = vmatprep.subr.mxu0 0.0
        %1601 = vmatpush2.msra.mxu0 0.0
        %1602 = vmatprep.subr.mxu0 0.0
        %1603 = vmatpush2.msra.mxu0 0.0
        %1604 = vmatprep.subr.mxu0 0.0
        %1605 = vmatpush2.msra.mxu0 0.0
        %1606 = vmatprep.subr.mxu0 0.0
        %1607 = vmatpush2.msra.mxu0 0.0
        %1608 = vmatprep.subr.mxu0 0.0
        %1609 = vmatpush2.msra.mxu0 0.0
        %1610 = vmatprep.subr.mxu0 0.0
        %1611 = vmatpush2.msra.mxu0 0.0
        %1612 = vmatprep.subr.mxu0 0.0
        %1613 = vmatpush2.msra.mxu0 0.0
        %1614 = vmatprep.subr.mxu0 0.0
        %1615 = vmatpush2.msra.mxu0 0.0
        %1616 = vmatprep.subr.mxu0 0.0
        %1617 = vmatpush2.msra.mxu0 0.0
        %1618 = vmatprep.subr.mxu0 0.0
        %1619 = vmatpush2.msra.mxu0 0.0
        %1620 = vmatprep.subr.mxu0 0.0
        %1621 = vmatpush2.msra.mxu0 0.0
        %1622 = vmatprep.subr.mxu0 0.0
        %1623 = vmatpush2.msra.mxu0 0.0
        %1624 = vmatprep.subr.mxu0 0.0
        %1625 = vmatpush2.msra.mxu0 0.0
        %1626 = vmatprep.subr.mxu0 0.0
        %1627 = vmatpush2.msra.mxu0 0.0
        %1628 = vmatprep.subr.mxu0 0.0
        %1629 = vmatpush2.msra.mxu0 0.0
        %1630 = vmatprep.mubr.f32.mxu0 0.0
        %1631 = vmatmul.mubr.f32.gmra.mxu0 %v1527
        %v1632 = vpop.f32.mrf.mxu0
        %v1633 = vadd.f32 %v1564, %v1632
        %v1634 = vpop.f32.mrf.mxu0
        %1635 = vmatprep.mubr.f32.mxu0 0.0
        %1636 = vmatmul.mubr.f32.gmra.mxu0 %v1528
        %v1637 = vpop.f32.mrf.mxu0
        %v1638 = vadd.f32 %v1564, %v1637
        %v1639 = vpop.f32.mrf.mxu0
        %1640 = vmatprep.mubr.f32.mxu0 0.0
        %1641 = vmatmul.mubr.f32.gmra.mxu0 %v1529
        %v1642 = vpop.f32.mrf.mxu0
        %v1643 = vadd.f32 %v1564, %v1642
        %v1644 = vpop.f32.mrf.mxu0
        %1645 = vmatprep.mubr.f32.mxu0 0.0
        %1646 = vmatmul.mubr.f32.gmra.mxu0 %v1530
        %v1647 = vpop.f32.mrf.mxu0
        %v1648 = vadd.f32 %v1564, %v1647
        %v1649 = vpop.f32.mrf.mxu0
        %1650 = vmatprep.mubr.f32.mxu0 0.0
        %1651 = vmatmul.mubr.f32.gmra.mxu0 %v1531
        %v1652 = vpop.f32.mrf.mxu0
        %v1653 = vadd.f32 %v1564, %v1652
        %v1654 = vpop.f32.mrf.mxu0
        %1655 = vmatprep.mubr.f32.mxu0 0.0
        %1656 = vmatmul.mubr.f32.gmra.mxu0 %v1532
        %v1657 = vpop.f32.mrf.mxu0
        %v1658 = vadd.f32 %v1564, %v1657
        %v1659 = vpop.f32.mrf.mxu0
        %1660 = vmatprep.mubr.f32.mxu0 0.0
        %1661 = vmatmul.mubr.f32.gmra.mxu0 %v1533
        %v1662 = vpop.f32.mrf.mxu0
        %v1663 = vadd.f32 %v1564, %v1662
        %v1664 = vpop.f32.mrf.mxu0
        %1665 = vmatprep.mubr.f32.mxu0 0.0
        %1666 = vmatmul.mubr.f32.gmra.mxu0 %v1534
        %v1667 = vpop.f32.mrf.mxu0
        %v1668 = vadd.f32 %v1564, %v1667
        %v1669 = vpop.f32.mrf.mxu0
        %1670 = vmatprep.mubr.f32.mxu0 0.0
        %1671 = vmatmul.mubr.f32.gmra.mxu0 %v1535
        %v1672 = vpop.f32.mrf.mxu0
        %v1673 = vadd.f32 %v1564, %v1672
        %v1674 = vpop.f32.mrf.mxu0
        %1675 = vmatprep.mubr.f32.mxu0 0.0
        %1676 = vmatmul.mubr.f32.gmra.mxu0 %v1536
        %v1677 = vpop.f32.mrf.mxu0
        %v1678 = vadd.f32 %v1564, %v1677
        %v1679 = vpop.f32.mrf.mxu0
        %1680 = vmatprep.mubr.f32.mxu0 0.0
        %1681 = vmatmul.mubr.f32.gmra.mxu0 %v1537
        %v1682 = vpop.f32.mrf.mxu0
        %v1683 = vadd.f32 %v1564, %v1682
        %v1684 = vpop.f32.mrf.mxu0
        %1685 = vmatprep.mubr.f32.mxu0 0.0
        %1686 = vmatmul.mubr.f32.gmra.mxu0 %v1538
        %v1687 = vpop.f32.mrf.mxu0
        %v1688 = vadd.f32 %v1564, %v1687
        %v1689 = vpop.f32.mrf.mxu0
        %1690 = vmatprep.mubr.f32.mxu0 0.0
        %1691 = vmatmul.mubr.f32.gmra.mxu0 %v1539
        %v1692 = vpop.f32.mrf.mxu0
        %v1693 = vadd.f32 %v1564, %v1692
        %v1694 = vpop.f32.mrf.mxu0
        %1695 = vmatprep.mubr.f32.mxu0 0.0
        %1696 = vmatmul.mubr.f32.gmra.mxu0 %v1540
        %v1697 = vpop.f32.mrf.mxu0
        %v1698 = vadd.f32 %v1564, %v1697
        %v1699 = vpop.f32.mrf.mxu0
        %1700 = vmatprep.mubr.f32.mxu0 0.0
        %1701 = vmatmul.mubr.f32.gmra.mxu0 %v1541
        %v1702 = vpop.f32.mrf.mxu0
        %v1703 = vadd.f32 %v1564, %v1702
        %v1704 = vpop.f32.mrf.mxu0
        %1705 = vmatprep.mubr.f32.mxu0 0.0
        %1706 = vmatmul.mubr.f32.gmra.mxu0 %v1542
        %v1707 = vpop.f32.mrf.mxu0
        %v1708 = vadd.f32 %v1564, %v1707
        %v1709 = vpop.f32.mrf.mxu0
        %1710 = vdwg.mxu0
        %v1711 = vxor.u32 %v1633, 2147483648
        %v1712 = vxor.u32 %v1638, 2147483648
        %v1713 = vxor.u32 %v1643, 2147483648
        %v1714 = vxor.u32 %v1648, 2147483648
        %v1715 = vxor.u32 %v1653, 2147483648
        %v1716 = vxor.u32 %v1658, 2147483648
        %v1717 = vxor.u32 %v1663, 2147483648
        %v1718 = vxor.u32 %v1668, 2147483648
        %v1719 = vxor.u32 %v1673, 2147483648
        %v1720 = vxor.u32 %v1678, 2147483648
        %v1721 = vxor.u32 %v1683, 2147483648
        %v1722 = vxor.u32 %v1688, 2147483648
        %v1723 = vxor.u32 %v1693, 2147483648
        %v1724 = vxor.u32 %v1698, 2147483648
        %v1725 = vxor.u32 %v1703, 2147483648
        %v1726 = vxor.u32 %v1708, 2147483648
        %v1727 = vmul.f32 %v1711, 1.442695
        %v1728 = vpow.pop %v1727
        %v1729 = vmul.f32 %v1712, 1.442695
        %v1730 = vpow.pop %v1729
        %v1731 = vmul.f32 %v1713, 1.442695
        %v1732 = vpow.pop %v1731
        %v1733 = vmul.f32 %v1714, 1.442695
        %v1734 = vpow.pop %v1733
        %v1735 = vmul.f32 %v1715, 1.442695
        %v1736 = vpow.pop %v1735
        %v1737 = vmul.f32 %v1716, 1.442695
        %v1738 = vpow.pop %v1737
        %v1739 = vmul.f32 %v1717, 1.442695
        %v1740 = vpow.pop %v1739
        %v1741 = vmul.f32 %v1718, 1.442695
        %v1742 = vpow.pop %v1741
        %v1743 = vmul.f32 %v1719, 1.442695
        %v1744 = vpow.pop %v1743
        %v1745 = vmul.f32 %v1720, 1.442695
        %v1746 = vpow.pop %v1745
        %v1747 = vmul.f32 %v1721, 1.442695
        %v1748 = vpow.pop %v1747
        %v1749 = vmul.f32 %v1722, 1.442695
        %v1750 = vpow.pop %v1749
        %v1751 = vmul.f32 %v1723, 1.442695
        %v1752 = vpow.pop %v1751
        %v1753 = vmul.f32 %v1724, 1.442695
        %v1754 = vpow.pop %v1753
        %v1755 = vmul.f32 %v1725, 1.442695
        %v1756 = vpow.pop %v1755
        %v1757 = vmul.f32 %v1726, 1.442695
        %v1758 = vpow.pop %v1757
        %v1759 = vadd.f32 %v1728, 1.0
        %v1760 = vadd.f32 %v1730, 1.0
        %v1761 = vadd.f32 %v1732, 1.0
        %v1762 = vadd.f32 %v1734, 1.0
        %v1763 = vadd.f32 %v1736, 1.0
        %v1764 = vadd.f32 %v1738, 1.0
        %v1765 = vadd.f32 %v1740, 1.0
        %v1766 = vadd.f32 %v1742, 1.0
        %v1767 = vadd.f32 %v1744, 1.0
        %v1768 = vadd.f32 %v1746, 1.0
        %v1769 = vadd.f32 %v1748, 1.0
        %v1770 = vadd.f32 %v1750, 1.0
        %v1771 = vadd.f32 %v1752, 1.0
        %v1772 = vadd.f32 %v1754, 1.0
        %v1773 = vadd.f32 %v1756, 1.0
        %v1774 = vadd.f32 %v1758, 1.0
        %v1775 = vrcp.pop %v1759
        %v1776 = vmul.f32 1.0, %v1775
        %v1777 = vrcp.pop %v1760
        %v1778 = vmul.f32 1.0, %v1777
        %v1779 = vrcp.pop %v1761
        %v1780 = vmul.f32 1.0, %v1779
        %v1781 = vrcp.pop %v1762
        %v1782 = vmul.f32 1.0, %v1781
        %v1783 = vrcp.pop %v1763
        %v1784 = vmul.f32 1.0, %v1783
        %v1785 = vrcp.pop %v1764
        %v1786 = vmul.f32 1.0, %v1785
        %v1787 = vrcp.pop %v1765
        %v1788 = vmul.f32 1.0, %v1787
        %v1789 = vrcp.pop %v1766
        %v1790 = vmul.f32 1.0, %v1789
        %v1791 = vrcp.pop %v1767
        %v1792 = vmul.f32 1.0, %v1791
        %v1793 = vrcp.pop %v1768
        %v1794 = vmul.f32 1.0, %v1793
        %v1795 = vrcp.pop %v1769
        %v1796 = vmul.f32 1.0, %v1795
        %v1797 = vrcp.pop %v1770
        %v1798 = vmul.f32 1.0, %v1797
        %v1799 = vrcp.pop %v1771
        %v1800 = vmul.f32 1.0, %v1799
        %v1801 = vrcp.pop %v1772
        %v1802 = vmul.f32 1.0, %v1801
        %v1803 = vrcp.pop %v1773
        %v1804 = vmul.f32 1.0, %v1803
        %v1805 = vrcp.pop %v1774
        %v1806 = vmul.f32 1.0, %v1805
        %v1807 = vmul.f32 %v1633, %v1776
        %v1808 = vmul.f32 %v1638, %v1778
        %v1809 = vmul.f32 %v1643, %v1780
        %v1810 = vmul.f32 %v1648, %v1782
        %v1811 = vmul.f32 %v1653, %v1784
        %v1812 = vmul.f32 %v1658, %v1786
        %v1813 = vmul.f32 %v1663, %v1788
        %v1814 = vmul.f32 %v1668, %v1790
        %v1815 = vmul.f32 %v1673, %v1792
        %v1816 = vmul.f32 %v1678, %v1794
        %v1817 = vmul.f32 %v1683, %v1796
        %v1818 = vmul.f32 %v1688, %v1798
        %v1819 = vmul.f32 %v1693, %v1800
        %v1820 = vmul.f32 %v1698, %v1802
        %v1821 = vmul.f32 %v1703, %v1804
        %v1822 = vmul.f32 %v1708, %v1806
        %v1823 = vld [vmem:[%s3] sm:$0xff]
        %v1824 = vld [vmem:[%s3 + $0x8] sm:$0xff]
        %v1825 = vld [vmem:[%s3 + $0x10] sm:$0xff]
        %v1826 = vld [vmem:[%s3 + $0x18] sm:$0xff]
        %v1827 = vld [vmem:[%s4] sm:$0x1]
        %v1829 = vlaneseq
        %v1830 = vshrl.u32 %v1829, 7
        %v1831 = vsub.s32 0, %v1830
        %v1832 = vrot.slane %v1827, %v1831
        %vm1834 = vcmask 261120
        %v1836 = vsel %vm1834, %v1807, 0
        %v1839 = vsel %vm1834, %v1808, 0
        %v1842 = vsel %vm1834, %v1809, 0
        %v1845 = vsel %vm1834, %v1810, 0
        %v1848 = vsel %vm1834, %v1811, 0
        %v1851 = vsel %vm1834, %v1812, 0
        %v1854 = vsel %vm1834, %v1813, 0
        %v1857 = vsel %vm1834, %v1814, 0
        %v1860 = vsel %vm1834, %v1815, 0
        %v1863 = vsel %vm1834, %v1816, 0
        %v1866 = vsel %vm1834, %v1817, 0
        %v1869 = vsel %vm1834, %v1818, 0
        %v1872 = vsel %vm1834, %v1819, 0
        %v1875 = vsel %vm1834, %v1820, 0
        %v1878 = vsel %vm1834, %v1821, 0
        %v1881 = vsel %vm1834, %v1822, 0
        %1883 = vmatprep.subr.mxu0 0.0
        %1884 = vmatpush1.msra.mxu0 0.0
        %1885 = vmatprep.subr.mxu0 0.0
        %1886 = vmatpush1.msra.mxu0 0.0
        %1887 = vmatprep.subr.mxu0 0.0
        %1888 = vmatpush1.msra.mxu0 0.0
        %1889 = vmatprep.subr.mxu0 0.0
        %1890 = vmatpush1.msra.mxu0 0.0
        %1891 = vmatprep.subr.mxu0 0.0
        %1892 = vmatpush1.msra.mxu0 0.0
        %1893 = vmatprep.subr.mxu0 0.0
        %1894 = vmatpush1.msra.mxu0 0.0
        %1895 = vmatprep.subr.mxu0 0.0
        %1896 = vmatpush1.msra.mxu0 0.0
        %1897 = vmatprep.subr.mxu0 0.0
        %1898 = vmatpush1.msra.mxu0 0.0
        %1899 = vmatprep.subr.mxu0 0.0
        %1900 = vmatpush1.msra.mxu0 0.0
        %1901 = vmatprep.subr.mxu0 0.0
        %1902 = vmatpush1.msra.mxu0 0.0
        %1903 = vmatprep.subr.mxu0 0.0
        %1904 = vmatpush1.msra.mxu0 0.0
        %1905 = vmatprep.subr.mxu0 0.0
        %1906 = vmatpush1.msra.mxu0 0.0
        %1907 = vmatprep.subr.mxu0 0.0
        %1908 = vmatpush1.msra.mxu0 %v1826
        %1909 = vmatprep.subr.mxu0 0.0
        %1910 = vmatpush1.msra.mxu0 %v1825
        %1911 = vmatprep.subr.mxu0 0.0
        %1912 = vmatpush1.msra.mxu0 %v1824
        %1913 = vmatprep.subr.mxu0 0.0
        %1914 = vmatpush1.msra.mxu0 %v1823
        %1915 = vmatprep.subr.mxu0 0.0
        %1916 = vmatpush2.msra.mxu0 0.0
        %1917 = vmatprep.subr.mxu0 0.0
        %1918 = vmatpush2.msra.mxu0 0.0
        %1919 = vmatprep.subr.mxu0 0.0
        %1920 = vmatpush2.msra.mxu0 0.0
        %1921 = vmatprep.subr.mxu0 0.0
        %1922 = vmatpush2.msra.mxu0 0.0
        %1923 = vmatprep.subr.mxu0 0.0
        %1924 = vmatpush2.msra.mxu0 0.0
        %1925 = vmatprep.subr.mxu0 0.0
        %1926 = vmatpush2.msra.mxu0 0.0
        %1927 = vmatprep.subr.mxu0 0.0
        %1928 = vmatpush2.msra.mxu0 0.0
        %1929 = vmatprep.subr.mxu0 0.0
        %1930 = vmatpush2.msra.mxu0 0.0
        %1931 = vmatprep.subr.mxu0 0.0
        %1932 = vmatpush2.msra.mxu0 0.0
        %1933 = vmatprep.subr.mxu0 0.0
        %1934 = vmatpush2.msra.mxu0 0.0
        %1935 = vmatprep.subr.mxu0 0.0
        %1936 = vmatpush2.msra.mxu0 0.0
        %1937 = vmatprep.subr.mxu0 0.0
        %1938 = vmatpush2.msra.mxu0 0.0
        %1939 = vmatprep.subr.mxu0 0.0
        %1940 = vmatpush2.msra.mxu0 0.0
        %1941 = vmatprep.subr.mxu0 0.0
        %1942 = vmatpush2.msra.mxu0 0.0
        %1943 = vmatprep.subr.mxu0 0.0
        %1944 = vmatpush2.msra.mxu0 0.0
        %1945 = vmatprep.subr.mxu0 0.0
        %1946 = vmatpush2.msra.mxu0 0.0
        %1947 = vmatprep.mubr.f32.mxu0 0.0
        %1948 = vmatmul.mubr.f32.gmra.mxu0 %v1836
        %v1949 = vpop.f32.mrf.mxu0
        %v1950 = vadd.f32 %v1832, %v1949
        %v1951 = vpop.f32.mrf.mxu0
        %1952 = vmatprep.mubr.f32.mxu0 0.0
        %1953 = vmatmul.mubr.f32.gmra.mxu0 %v1839
        %v1954 = vpop.f32.mrf.mxu0
        %v1955 = vadd.f32 %v1832, %v1954
        %v1956 = vpop.f32.mrf.mxu0
        %1957 = vmatprep.mubr.f32.mxu0 0.0
        %1958 = vmatmul.mubr.f32.gmra.mxu0 %v1842
        %v1959 = vpop.f32.mrf.mxu0
        %v1960 = vadd.f32 %v1832, %v1959
        %v1961 = vpop.f32.mrf.mxu0
        %1962 = vmatprep.mubr.f32.mxu0 0.0
        %1963 = vmatmul.mubr.f32.gmra.mxu0 %v1845
        %v1964 = vpop.f32.mrf.mxu0
        %v1965 = vadd.f32 %v1832, %v1964
        %v1966 = vpop.f32.mrf.mxu0
        %1967 = vmatprep.mubr.f32.mxu0 0.0
        %1968 = vmatmul.mubr.f32.gmra.mxu0 %v1848
        %v1969 = vpop.f32.mrf.mxu0
        %v1970 = vadd.f32 %v1832, %v1969
        %v1971 = vpop.f32.mrf.mxu0
        %1972 = vmatprep.mubr.f32.mxu0 0.0
        %1973 = vmatmul.mubr.f32.gmra.mxu0 %v1851
        %v1974 = vpop.f32.mrf.mxu0
        %v1975 = vadd.f32 %v1832, %v1974
        %v1976 = vpop.f32.mrf.mxu0
        %1977 = vmatprep.mubr.f32.mxu0 0.0
        %1978 = vmatmul.mubr.f32.gmra.mxu0 %v1854
        %v1979 = vpop.f32.mrf.mxu0
        %v1980 = vadd.f32 %v1832, %v1979
        %v1981 = vpop.f32.mrf.mxu0
        %1982 = vmatprep.mubr.f32.mxu0 0.0
        %1983 = vmatmul.mubr.f32.gmra.mxu0 %v1857
        %v1984 = vpop.f32.mrf.mxu0
        %v1985 = vadd.f32 %v1832, %v1984
        %v1986 = vpop.f32.mrf.mxu0
        %1987 = vmatprep.mubr.f32.mxu0 0.0
        %1988 = vmatmul.mubr.f32.gmra.mxu0 %v1860
        %v1989 = vpop.f32.mrf.mxu0
        %v1990 = vadd.f32 %v1832, %v1989
        %v1991 = vpop.f32.mrf.mxu0
        %1992 = vmatprep.mubr.f32.mxu0 0.0
        %1993 = vmatmul.mubr.f32.gmra.mxu0 %v1863
        %v1994 = vpop.f32.mrf.mxu0
        %v1995 = vadd.f32 %v1832, %v1994
        %v1996 = vpop.f32.mrf.mxu0
        %1997 = vmatprep.mubr.f32.mxu0 0.0
        %1998 = vmatmul.mubr.f32.gmra.mxu0 %v1866
        %v1999 = vpop.f32.mrf.mxu0
        %v2000 = vadd.f32 %v1832, %v1999
        %v2001 = vpop.f32.mrf.mxu0
        %2002 = vmatprep.mubr.f32.mxu0 0.0
        %2003 = vmatmul.mubr.f32.gmra.mxu0 %v1869
        %v2004 = vpop.f32.mrf.mxu0
        %v2005 = vadd.f32 %v1832, %v2004
        %v2006 = vpop.f32.mrf.mxu0
        %2007 = vmatprep.mubr.f32.mxu0 0.0
        %2008 = vmatmul.mubr.f32.gmra.mxu0 %v1872
        %v2009 = vpop.f32.mrf.mxu0
        %v2010 = vadd.f32 %v1832, %v2009
        %v2011 = vpop.f32.mrf.mxu0
        %2012 = vmatprep.mubr.f32.mxu0 0.0
        %2013 = vmatmul.mubr.f32.gmra.mxu0 %v1875
        %v2014 = vpop.f32.mrf.mxu0
        %v2015 = vadd.f32 %v1832, %v2014
        %v2016 = vpop.f32.mrf.mxu0
        %2017 = vmatprep.mubr.f32.mxu0 0.0
        %2018 = vmatmul.mubr.f32.gmra.mxu0 %v1878
        %v2019 = vpop.f32.mrf.mxu0
        %v2020 = vadd.f32 %v1832, %v2019
        %v2021 = vpop.f32.mrf.mxu0
        %2022 = vmatprep.mubr.f32.mxu0 0.0
        %2023 = vmatmul.mubr.f32.gmra.mxu0 %v1881
        %v2024 = vpop.f32.mrf.mxu0
        %v2025 = vadd.f32 %v1832, %v2024
        %v2026 = vpop.f32.mrf.mxu0
        %2027 = vdwg.mxu0
        %2028 = vst [vmem:[%s231] sm:$0xff] %v1950
        %2029 = vst [vmem:[%s231 + $0x8] sm:$0xff] %v1955
        %2030 = vst [vmem:[%s231 + $0x10] sm:$0xff] %v1960
        %2031 = vst [vmem:[%s231 + $0x18] sm:$0xff] %v1965
        %2032 = vst [vmem:[%s231 + $0x20] sm:$0xff] %v1970
        %2033 = vst [vmem:[%s231 + $0x28] sm:$0xff] %v1975
        %2034 = vst [vmem:[%s231 + $0x30] sm:$0xff] %v1980
        %2035 = vst [vmem:[%s231 + $0x38] sm:$0xff] %v1985
        %2036 = vst [vmem:[%s231 + $0x40] sm:$0xff] %v1990
        %2037 = vst [vmem:[%s231 + $0x48] sm:$0xff] %v1995
        %2038 = vst [vmem:[%s231 + $0x50] sm:$0xff] %v2000
        %2039 = vst [vmem:[%s231 + $0x58] sm:$0xff] %v2005
        %2040 = vst [vmem:[%s231 + $0x60] sm:$0xff] %v2010
        %2041 = vst [vmem:[%s231 + $0x68] sm:$0xff] %v2015
        %2042 = vst [vmem:[%s231 + $0x70] sm:$0xff] %v2020
        %2043 = vst [vmem:[%s231 + $0x78] sm:$0xff] %v2025
        %s2044 = sand.u32 %s151, 1
        %s2045 = scalar_lea.sflag [#allocation5], %s2044
        %s2046 = sand.u32 %s151, 1
        %s2047 = smul.addr %s2046, 128
        %s2048 = scalar_lea.vmem [#allocation4], %s2047
        // Predicated region
        $region45: #{tpu_custom_call.1} parent=39 // pred_check
          %p2049 = pneg %p161
        $region46: #{tpu_custom_call.1} parent=39 // pred_check_branch
          %2051 = sbr.rel (%p2049) target = $region48
        $region47: #{tpu_custom_call.1} parent=39 // pred_region
          %s2052 = smul.u32 16, %s24
          %s2054 = ssub.s32 2048, 2048
          %2055 = vsyncadd %s2045, %s2054
          %s2056 = smul.addr %s23, 32
          %s2057 = sadd.s32 %s2052, %s2056
          %s2058 = smul.addr %s2057, 128
          %s2059 = scalar_lea.hbm %s5, %s2058
          %s2060 = sshll.u32 %s2048, 4
          %s2061 = int_to_ptr.vmem [resolvable:$true] %s2060
          %2066 = dma.vmem_to_hbm [thread:$0]  %s2061, 2048, %s2059, %s2045, 128, 128, 8
        $region48: #{tpu_custom_call.1} parent=39 // pred_fallthru
          _
      $region40: #{tpu_custom_call.1} parent=5 // pred_fallthru
        _
      %p2067 = scmp.le.s32.totalorder 2, %s14
      // Predicated region
      $region49: #{tpu_custom_call.1} parent=5 // pred_check
        %p2068 = pneg %p2067
      $region50: #{tpu_custom_call.1} parent=5 // pred_check_branch
        %2070 = sbr.rel (%p2068) target = $region52
      $region51: #{tpu_custom_call.1} parent=5 // pred_region
        %s2071 = ssub.s32 %s14, 2
        // Predicated region
        $region53: #{tpu_custom_call.1} parent=51 // pred_check
          %p2072 = pneg %p167
        $region54: #{tpu_custom_call.1} parent=51 // pred_check_branch
          %2074 = sbr.rel (%p2072) target = $region56
        $region55: #{tpu_custom_call.1} parent=51 // pred_region
          %s2075 = sand.u32 %s152, 1
          %s2076 = scalar_lea.sflag [#allocation5], %s2075
          %s2077 = sand.u32 %s152, 1
          %s2078 = smul.addr %s2077, 128
          %s2079 = scalar_lea.vmem [#allocation4], %s2078
          %2080 = dma.done %s2076, 2048
        $region56: #{tpu_custom_call.1} parent=51 // pred_fallthru
          _
      $region52: #{tpu_custom_call.1} parent=5 // pred_fallthru
        _
    $region6: #{tpu_custom_call.1} parent=1 // loop_footer
      %s18 = sadd.s32 1, %s14
    $region7: #{tpu_custom_call.1} parent=1 // loop_footer_branch
      %13 = sbr.rel target = $region3
    $region8: #{tpu_custom_call.1} parent=1 // loop_exit
      _
    %2081 = vsyncpa [#allocation5], 1
    %s2082 = scalar_lea.sflag [#allocation5], 1
    %2083 = vsyncpa %s2082, 1

</llo_original>
